<compile_context>
chip_gen: v6e
topology: v6e:2x2x1
jax: 0.10.0
libtpu: 0.0.40
codegen_flags: <defaults>
</compile_context>

<pallas_src>
import functools

import jax
import jax.numpy as jnp
from jax.experimental import pallas as pl
from jax.experimental.pallas import tpu as pltpu


def _round_up(x, m):
    return ((x + m - 1) // m) * m


def _conv2d_block_kernel(x_ref, w_ref, b_ref, o_ref, *, taps, ts, twin, single_tile):
    # x_ref: (Cin, L_in_pad)      whole padded+flattened image (VMEM resident)
    # w_ref: (KH*KW, Cout, Cin)   per-tap weight matrices
    # b_ref: (Cout, 1)            bias
    # o_ref: (Cout, TS)           lane-dense output tile (flat spatial axis)
    if single_tile:
        win = x_ref[...]                                   # (Cin, TWIN), TWIN == L_in_pad
    else:
        base = pl.multiple_of(pl.program_id(1) * ts, 128)  # lane-aligned dynamic window
        win = x_ref[:, pl.ds(base, twin)]                  # (Cin, TWIN)

    # Direct conv: accumulate KH*KW shifted matmuls in f32 registers.
    off0 = taps[0]
    acc = jnp.dot(w_ref[0], win[:, off0:off0 + ts],
                  preferred_element_type=jnp.float32)      # (Cout, TS)
    for t in range(1, len(taps)):
        off = taps[t]
        acc = acc + jnp.dot(w_ref[t], win[:, off:off + ts],
                            preferred_element_type=jnp.float32)

    acc = acc + b_ref[...]                                 # fused bias (broadcast over lanes)
    o_ref[...] = jnp.maximum(acc, 0.0).astype(o_ref.dtype)  # fused ReLU, f32 epilogue


def conv2d_block(x_nchw, w_oihw, bias, *, stride=1, padding=0, max_tile=2048):
    """Forward pass of Conv2dBlock: ZeroPad2d(padding) -> Conv2d(stride) -> ReLU."""
    N, Cin, H, W = x_nchw.shape
    Cout, Cin_w, KH, KW = w_oihw.shape
    assert Cin == Cin_w

    # ---- ZeroPad2d + flatten spatial axes (pure layout plumbing, 1x bytes) ----
    Hp, Wp = H + 2 * padding, W + 2 * padding
    x_pad = jnp.pad(x_nchw, ((0, 0), (0, 0), (padding, padding), (padding, padding)))

    # Stride-1 "valid" extents; torch's strided conv is the ::stride subsample of it.
    OH1, OW1 = Hp - KH + 1, Wp - KW + 1
    OH = (Hp - KH) // stride + 1
    OW = (Wp - KW) // stride + 1

    # Flat spatial frame: output position p = oh*Wp + ow uses input p + kh*Wp + kw.
    L_out = OH1 * Wp
    # Lane-dense tile: as big as possible, bounded so acc (Cout x TS f32) stays in regs.
    ts_cap = max(128, min(max_tile, _round_up(32768 // max(Cout, 1), 128)))
    ts = min(_round_up(L_out, 128), ts_cap)
    L_out_pad = _round_up(L_out, ts)
    n_s = L_out_pad // ts

    halo = (KH - 1) * Wp + (KW - 1)                 # extra input lanes a tile needs
    halo_pad = _round_up(halo, 128) if halo > 0 else 0
    twin = ts + halo_pad
    L_in_pad = L_out_pad + halo_pad                 # zero-padded flat input length

    x_flat = jnp.pad(x_pad.reshape(N, Cin, Hp * Wp),
                     ((0, 0), (0, 0), (0, L_in_pad - Hp * Wp)))
    # OIHW -> (KH*KW, Cout, Cin); tap index t = kh*KW + kw.
    w_taps = jnp.transpose(w_oihw, (2, 3, 0, 1)).reshape(KH * KW, Cout, Cin)
    b2 = bias.reshape(Cout, 1)

    taps = tuple(kh * Wp + kw for kh in range(KH) for kw in range(KW))
    kernel = functools.partial(_conv2d_block_kernel, taps=taps, ts=ts, twin=twin,
                               single_tile=(n_s == 1))

    flops = 2 * N * Cout * KH * KW * Cin * OH * OW
    bytes_accessed = ((x_flat.size + w_taps.size + b2.size) * 4
                      + N * Cout * L_out_pad * x_nchw.dtype.itemsize)

    out_flat = pl.pallas_call(
        kernel,
        out_shape=jax.ShapeDtypeStruct((N, Cout, L_out_pad), x_nchw.dtype),
        grid=(N, n_s),
        in_specs=[
            # whole padded image, resident across the spatial-tile axis
            pl.BlockSpec((pl.Squeezed(), Cin, L_in_pad), lambda n, s: (n, 0, 0)),
            # weights / bias resident across the whole grid
            pl.BlockSpec((KH * KW, Cout, Cin), lambda n, s: (0, 0, 0)),
            pl.BlockSpec((Cout, 1), lambda n, s: (0, 0)),
        ],
        out_specs=pl.BlockSpec((pl.Squeezed(), Cout, ts), lambda n, s: (n, 0, s)),
        compiler_params=pltpu.CompilerParams(
            dimension_semantics=("parallel", "parallel")),
        cost_estimate=pl.CostEstimate(flops=flops, transcendentals=0,
                                      bytes_accessed=bytes_accessed),
    )(x_flat, w_taps, b2)

    # Un-pad the flat spatial axis; drop invalid columns; apply stride.
    out = out_flat[:, :, :L_out].reshape(N, Cout, OH1, Wp)
    out = out[:, :, ::stride, :OW1:stride]
    return out


if __name__ == "__main__":
    # Conv2dBlock(input_dim=4, output_dim=8, kernel_size=3, stride=1, padding=1,
    #             norm='none', activation='relu', pad_type='zero')
    N, Cin, H, W = 2, 4, 16, 16
    Cout, KH, KW = 8, 3, 3
    stride, padding = 1, 1

    key = jax.random.PRNGKey(0)
    kx, kwt, kb = jax.random.split(key, 3)
    x = jax.random.normal(kx, (N, Cin, H, W), dtype=jnp.float32)
    w = jax.random.normal(kwt, (Cout, Cin, KH, KW), dtype=jnp.float32) * 0.1
    b = jax.random.normal(kb, (Cout,), dtype=jnp.float32) * 0.1

    out = conv2d_block(x, w, b, stride=stride, padding=padding)
    out = jax.block_until_ready(out)

    # sanity check against XLA's conv (same semantics as torch ZeroPad2d+Conv2d+ReLU)
    ref = jax.lax.conv_general_dilated(
        jnp.pad(x, ((0, 0), (0, 0), (padding, padding), (padding, padding))),
        w, window_strides=(stride, stride), padding="VALID",
        dimension_numbers=("NCHW", "OIHW", "NCHW"))
    ref = jnp.maximum(ref + b[None, :, None, None], 0.0)
    assert out.shape == (N, Cout, H, W)
    assert jnp.allclose(out, ref, atol=1e-3, rtol=1e-3)

    print("KERNEL_OK")
</pallas_src>

<mosaic_0001>
module attributes {stable_mosaic.version = 11 : i64} {
  func.func @_conv2d_block_kernel(%arg0: i32, %arg1: i32, %arg2: memref<1x4x512xf32, #tpu.memory_space<vmem>>, %arg3: memref<9x8x4xf32, #tpu.memory_space<vmem>>, %arg4: memref<8x1xf32, #tpu.memory_space<vmem>>, %arg5: memref<1x8x384xf32, #tpu.memory_space<vmem>>) attributes {dimension_semantics = [#tpu.dimension_semantics<parallel>, #tpu.dimension_semantics<parallel>], iteration_bounds = array<i64: 2, 1>, scalar_prefetch = 0 : i64, scratch_operands = 0 : i64, tpu.core_type = #tpu.core_type<tc>, window_params = [{transform_indices = @transform_0, window_bounds = array<i64: 1, 4, 512>}, {pipeline_mode = #tpu.pipeline_mode<synchronous>, transform_indices = @transform_1, window_bounds = array<i64: 9, 8, 4>}, {pipeline_mode = #tpu.pipeline_mode<synchronous>, transform_indices = @transform_2, window_bounds = array<i64: 8, 1>}, {transform_indices = @transform_3, window_bounds = array<i64: 1, 8, 384>}]} {
    %c0 = arith.constant 0 : index
    %c0_0 = arith.constant 0 : index
    %c0_1 = arith.constant 0 : index
    %0 = vector.load %arg2[%c0, %c0_0, %c0_1] : memref<1x4x512xf32, #tpu.memory_space<vmem>>, vector<1x4x512xf32>
    %1 = vector.shape_cast %0 : vector<1x4x512xf32> to vector<4x512xf32>
    %c0_2 = arith.constant 0 : index
    %c0_3 = arith.constant 0 : index
    %c0_4 = arith.constant 0 : index
    %2 = vector.load %arg3[%c0_2, %c0_3, %c0_4] : memref<9x8x4xf32, #tpu.memory_space<vmem>>, vector<1x8x4xf32>
    %3 = vector.shape_cast %2 : vector<1x8x4xf32> to vector<8x4xf32>
    %4 = vector.extract_strided_slice %1 {offsets = [0, 0], sizes = [4, 384], strides = [1, 1]} : vector<4x512xf32> to vector<4x384xf32>
    %cst = arith.constant dense<0.000000e+00> : vector<8x384xf32>
    %5 = tpu.matmul %3, %4, %cst {dimension_numbers = #tpu.dot_dimension_numbers<[1], [0], [0], [1], [0, 0, 1, 1], [], []>} : vector<8x4xf32>, vector<4x384xf32>, vector<8x384xf32> -> vector<8x384xf32>
    %c1 = arith.constant 1 : index
    %c0_5 = arith.constant 0 : index
    %c0_6 = arith.constant 0 : index
    %6 = vector.load %arg3[%c1, %c0_5, %c0_6] : memref<9x8x4xf32, #tpu.memory_space<vmem>>, vector<1x8x4xf32>
    %7 = vector.shape_cast %6 : vector<1x8x4xf32> to vector<8x4xf32>
    %8 = vector.extract_strided_slice %1 {offsets = [0, 1], sizes = [4, 384], strides = [1, 1]} : vector<4x512xf32> to vector<4x384xf32>
    %cst_7 = arith.constant dense<0.000000e+00> : vector<8x384xf32>
    %9 = tpu.matmul %7, %8, %cst_7 {dimension_numbers = #tpu.dot_dimension_numbers<[1], [0], [0], [1], [0, 0, 1, 1], [], []>} : vector<8x4xf32>, vector<4x384xf32>, vector<8x384xf32> -> vector<8x384xf32>
    %10 = arith.addf %5, %9 : vector<8x384xf32>
    %c2 = arith.constant 2 : index
    %c0_8 = arith.constant 0 : index
    %c0_9 = arith.constant 0 : index
    %11 = vector.load %arg3[%c2, %c0_8, %c0_9] : memref<9x8x4xf32, #tpu.memory_space<vmem>>, vector<1x8x4xf32>
    %12 = vector.shape_cast %11 : vector<1x8x4xf32> to vector<8x4xf32>
    %13 = vector.extract_strided_slice %1 {offsets = [0, 2], sizes = [4, 384], strides = [1, 1]} : vector<4x512xf32> to vector<4x384xf32>
    %cst_10 = arith.constant dense<0.000000e+00> : vector<8x384xf32>
    %14 = tpu.matmul %12, %13, %cst_10 {dimension_numbers = #tpu.dot_dimension_numbers<[1], [0], [0], [1], [0, 0, 1, 1], [], []>} : vector<8x4xf32>, vector<4x384xf32>, vector<8x384xf32> -> vector<8x384xf32>
    %15 = arith.addf %10, %14 : vector<8x384xf32>
    %c3 = arith.constant 3 : index
    %c0_11 = arith.constant 0 : index
    %c0_12 = arith.constant 0 : index
    %16 = vector.load %arg3[%c3, %c0_11, %c0_12] : memref<9x8x4xf32, #tpu.memory_space<vmem>>, vector<1x8x4xf32>
    %17 = vector.shape_cast %16 : vector<1x8x4xf32> to vector<8x4xf32>
    %18 = vector.extract_strided_slice %1 {offsets = [0, 18], sizes = [4, 384], strides = [1, 1]} : vector<4x512xf32> to vector<4x384xf32>
    %cst_13 = arith.constant dense<0.000000e+00> : vector<8x384xf32>
    %19 = tpu.matmul %17, %18, %cst_13 {dimension_numbers = #tpu.dot_dimension_numbers<[1], [0], [0], [1], [0, 0, 1, 1], [], []>} : vector<8x4xf32>, vector<4x384xf32>, vector<8x384xf32> -> vector<8x384xf32>
    %20 = arith.addf %15, %19 : vector<8x384xf32>
    %c4 = arith.constant 4 : index
    %c0_14 = arith.constant 0 : index
    %c0_15 = arith.constant 0 : index
    %21 = vector.load %arg3[%c4, %c0_14, %c0_15] : memref<9x8x4xf32, #tpu.memory_space<vmem>>, vector<1x8x4xf32>
    %22 = vector.shape_cast %21 : vector<1x8x4xf32> to vector<8x4xf32>
    %23 = vector.extract_strided_slice %1 {offsets = [0, 19], sizes = [4, 384], strides = [1, 1]} : vector<4x512xf32> to vector<4x384xf32>
    %cst_16 = arith.constant dense<0.000000e+00> : vector<8x384xf32>
    %24 = tpu.matmul %22, %23, %cst_16 {dimension_numbers = #tpu.dot_dimension_numbers<[1], [0], [0], [1], [0, 0, 1, 1], [], []>} : vector<8x4xf32>, vector<4x384xf32>, vector<8x384xf32> -> vector<8x384xf32>
    %25 = arith.addf %20, %24 : vector<8x384xf32>
    %c5 = arith.constant 5 : index
    %c0_17 = arith.constant 0 : index
    %c0_18 = arith.constant 0 : index
    %26 = vector.load %arg3[%c5, %c0_17, %c0_18] : memref<9x8x4xf32, #tpu.memory_space<vmem>>, vector<1x8x4xf32>
    %27 = vector.shape_cast %26 : vector<1x8x4xf32> to vector<8x4xf32>
    %28 = vector.extract_strided_slice %1 {offsets = [0, 20], sizes = [4, 384], strides = [1, 1]} : vector<4x512xf32> to vector<4x384xf32>
    %cst_19 = arith.constant dense<0.000000e+00> : vector<8x384xf32>
    %29 = tpu.matmul %27, %28, %cst_19 {dimension_numbers = #tpu.dot_dimension_numbers<[1], [0], [0], [1], [0, 0, 1, 1], [], []>} : vector<8x4xf32>, vector<4x384xf32>, vector<8x384xf32> -> vector<8x384xf32>
    %30 = arith.addf %25, %29 : vector<8x384xf32>
    %c6 = arith.constant 6 : index
    %c0_20 = arith.constant 0 : index
    %c0_21 = arith.constant 0 : index
    %31 = vector.load %arg3[%c6, %c0_20, %c0_21] : memref<9x8x4xf32, #tpu.memory_space<vmem>>, vector<1x8x4xf32>
    %32 = vector.shape_cast %31 : vector<1x8x4xf32> to vector<8x4xf32>
    %33 = vector.extract_strided_slice %1 {offsets = [0, 36], sizes = [4, 384], strides = [1, 1]} : vector<4x512xf32> to vector<4x384xf32>
    %cst_22 = arith.constant dense<0.000000e+00> : vector<8x384xf32>
    %34 = tpu.matmul %32, %33, %cst_22 {dimension_numbers = #tpu.dot_dimension_numbers<[1], [0], [0], [1], [0, 0, 1, 1], [], []>} : vector<8x4xf32>, vector<4x384xf32>, vector<8x384xf32> -> vector<8x384xf32>
    %35 = arith.addf %30, %34 : vector<8x384xf32>
    %c7 = arith.constant 7 : index
    %c0_23 = arith.constant 0 : index
    %c0_24 = arith.constant 0 : index
    %36 = vector.load %arg3[%c7, %c0_23, %c0_24] : memref<9x8x4xf32, #tpu.memory_space<vmem>>, vector<1x8x4xf32>
    %37 = vector.shape_cast %36 : vector<1x8x4xf32> to vector<8x4xf32>
    %38 = vector.extract_strided_slice %1 {offsets = [0, 37], sizes = [4, 384], strides = [1, 1]} : vector<4x512xf32> to vector<4x384xf32>
    %cst_25 = arith.constant dense<0.000000e+00> : vector<8x384xf32>
    %39 = tpu.matmul %37, %38, %cst_25 {dimension_numbers = #tpu.dot_dimension_numbers<[1], [0], [0], [1], [0, 0, 1, 1], [], []>} : vector<8x4xf32>, vector<4x384xf32>, vector<8x384xf32> -> vector<8x384xf32>
    %40 = arith.addf %35, %39 : vector<8x384xf32>
    %c8 = arith.constant 8 : index
    %c0_26 = arith.constant 0 : index
    %c0_27 = arith.constant 0 : index
    %41 = vector.load %arg3[%c8, %c0_26, %c0_27] : memref<9x8x4xf32, #tpu.memory_space<vmem>>, vector<1x8x4xf32>
    %42 = vector.shape_cast %41 : vector<1x8x4xf32> to vector<8x4xf32>
    %43 = vector.extract_strided_slice %1 {offsets = [0, 38], sizes = [4, 384], strides = [1, 1]} : vector<4x512xf32> to vector<4x384xf32>
    %cst_28 = arith.constant dense<0.000000e+00> : vector<8x384xf32>
    %44 = tpu.matmul %42, %43, %cst_28 {dimension_numbers = #tpu.dot_dimension_numbers<[1], [0], [0], [1], [0, 0, 1, 1], [], []>} : vector<8x4xf32>, vector<4x384xf32>, vector<8x384xf32> -> vector<8x384xf32>
    %45 = arith.addf %40, %44 : vector<8x384xf32>
    %c0_29 = arith.constant 0 : index
    %c0_30 = arith.constant 0 : index
    %46 = vector.load %arg4[%c0_29, %c0_30] : memref<8x1xf32, #tpu.memory_space<vmem>>, vector<8x1xf32>
    %47 = vector.broadcast %46 : vector<8x1xf32> to vector<8x384xf32>
    %48 = arith.addf %45, %47 : vector<8x384xf32>
    %cst_31 = arith.constant 0.000000e+00 : f32
    %49 = vector.broadcast %cst_31 : f32 to vector<8x384xf32>
    %50 = arith.maximumf %48, %49 : vector<8x384xf32>
    %c0_32 = arith.constant 0 : index
    %c0_33 = arith.constant 0 : index
    %c0_34 = arith.constant 0 : index
    %51 = vector.load %arg5[%c0_32, %c0_33, %c0_34] : memref<1x8x384xf32, #tpu.memory_space<vmem>>, vector<1x8x384xf32>
    %52 = vector.shape_cast %51 : vector<1x8x384xf32> to vector<8x384xf32>
    %53 = vector.shape_cast %50 : vector<8x384xf32> to vector<1x8x384xf32>
    tpu.vector_store %arg5[%c0_32, %c0_33, %c0_34], %53 {strides = array<i32>} : memref<1x8x384xf32, #tpu.memory_space<vmem>>, vector<1x8x384xf32>,
    return
  }
  func.func @transform_0(%arg0: i32, %arg1: i32) -> (i32, i32, i32) {
    %c0_i32 = arith.constant 0 : i32
    %c0_i32_0 = arith.constant 0 : i32
    %c0_i32_1 = arith.constant 0 : i32
    return %arg0, %c0_i32, %c0_i32_0 : i32, i32, i32
  }
  func.func @transform_1(%arg0: i32, %arg1: i32) -> (i32, i32, i32) {
    %c0_i32 = arith.constant 0 : i32
    %c0_i32_0 = arith.constant 0 : i32
    %c0_i32_1 = arith.constant 0 : i32
    %c0_i32_2 = arith.constant 0 : i32
    return %c0_i32, %c0_i32_0, %c0_i32_1 : i32, i32, i32
  }
  func.func @transform_2(%arg0: i32, %arg1: i32) -> (i32, i32) {
    %c0_i32 = arith.constant 0 : i32
    %c0_i32_0 = arith.constant 0 : i32
    %c0_i32_1 = arith.constant 0 : i32
    return %c0_i32, %c0_i32_0 : i32, i32
  }
  func.func @transform_3(%arg0: i32, %arg1: i32) -> (i32, i32, i32) {
    %c0_i32 = arith.constant 0 : i32
    %c0_i32_0 = arith.constant 0 : i32
    return %arg0, %c0_i32, %arg1 : i32, i32, i32
  }
}

</mosaic_0001>

<llo_original>
// kernel: tpu_custom_call.1
$region0: #{tpu_custom_call.1}
  #allocation0 [shape = 'u32[]', space=smem, size = 0x4, offset = 0x4, fixed_abs, tag = 'smem constant byte address 0x4 - core index']
  #allocation1 [shape = 'u32[144,128]{1,0:T(1,128)}', space=vmem, size = 0x12000, scoped, tag = 'internal scratch']
  %s0 = inlined_call_operand.vmem [shape: f32[2,4,512], index: 0, kind: input, shape index: {}]
  %s1 = inlined_call_operand.vmem [shape: f32[9,8,4], index: 1, kind: input, shape index: {}]
  %s2 = inlined_call_operand.vmem [shape: f32[8,1], index: 2, kind: input, shape index: {}]
  %s3 = inlined_call_operand.hbm [shape: f32[2,8,384], index: 3, kind: output, shape index: {}]
  %s4 = sld [smem:[#allocation0]]
  $region45: #{tpu_custom_call.1} parent=0
    _
  %s6 = ssub.s32 1, %s4
  %s7 = scalar_select 0, %s6, %s4
  $region1: #{tpu_custom_call.1} parent=0
    #allocation2 [shape = 'u8[24576]{0}', space=vmem, size = 0x6000, scoped, tag = 'output window, operand 0']
    #allocation3 [shape = 's32[2]{0}', space=sflag, size = 0x8, scoped, tag = 'scoped memory for tpu_custom_call.1']
    %8 = vsyncpa [#allocation3], 0
    %s9 = scalar_lea.sflag [#allocation3], 1
    %10 = vsyncpa %s9, 0
    loop: start=0, step=1, limit=4
    $region2: #{tpu_custom_call.1} parent=1 // loop_pre_header
      _
    $region3: #{tpu_custom_call.1} parent=1 // loop_header
      %s12 = sphi 0, %s16
      %p13 = scmp.ge.s32.totalorder %s12, 4
      %s19 = sphi 0, %s31
      %s20 = sphi 0, %s27
      %s21 = sphi 0, %s19
      %s22 = sphi 0, %s20
      %s23 = sphi 0, %s21
      %s24 = sphi 0, %s22
      %s34 = sphi 0, %s36
      %s37 = sphi 0, %s34
      %s38 = sphi 0, %s37
      %s54 = sphi 0, %s38
      %s58 = sphi 0, %s58
      %s60 = sphi 0, %s58
      %s61 = sphi 0, %s60
      %s75 = sphi 0, %s61
      %s79 = sphi 0, %s79
      %s81 = sphi 0, %s79
      %s82 = sphi 0, %s81
      %s96 = sphi 0, %s82
      %s104 = sphi 0, %s106
      %s107 = sphi 0, %s104
      %s108 = sphi 0, %s107
      %s124 = sphi 0, %s108
    $region4: #{tpu_custom_call.1} parent=1 // loop_header_branch
      %15 = sbr.rel (%p13) target = $region8
    $region5: #{tpu_custom_call.1} parent=1 // loop_body
      %s17 = ssub.s32 %s12, 1
      %s18 = ssub.s32 %s12, 2
      %s25 = sadd.s32 1, %s20
      %p26 = scmp.ge.s32.totalorder %s25, 1
      %s27 = scalar_select %p26, 0, %s25
      %s28 = sadd.s32 1, %s19
      %s29 = scalar_select %p26, %s28, %s19
      %p30 = scmp.ge.s32.totalorder %s29, 2
      %s31 = scalar_select %p30, 0, %s29
      %s32 = ssub.s32 %s19, %s31
      %p33 = scmp.eq.s32.totalorder %s32, 0
      %s35 = sadd.s32 %s34, 1
      %s36 = scalar_select %p33, %s34, %s35
      %p39 = pneg %p33
      %p40 = scmp.eq.s32.totalorder %s12, 1
      %p41 = por %p39, %p40
      %p42 = scmp.ne.s32.totalorder %s34, %s37
      %p43 = scmp.eq.s32.totalorder %s12, 0
      %p44 = por %p42, %p43
      %p45 = scmp.ne.s32.totalorder %s34, %s37
      %p46 = scmp.eq.s32.totalorder %s17, 1
      %p47 = por %p45, %p46
      %p48 = scmp.ne.s32.totalorder %s37, %s38
      %p49 = scmp.eq.s32.totalorder %s17, 0
      %p50 = por %p48, %p49
      %p51 = scmp.ne.s32.totalorder %s37, %s38
      %p52 = scmp.eq.s32.totalorder %s18, 1
      %p53 = por %p51, %p52
      %p55 = scmp.ne.s32.totalorder %s38, %s54
      %p56 = scmp.eq.s32.totalorder %s18, 0
      %p57 = por %p55, %p56
      %s59 = sadd.s32 %s58, 1
      %p62 = scmp.eq.s32.totalorder %s12, 1
      %p63 = scmp.ne.s32.totalorder %s58, %s60
      %p64 = scmp.eq.s32.totalorder %s12, 0
      %p65 = por %p63, %p64
      %p66 = scmp.ne.s32.totalorder %s58, %s60
      %p67 = scmp.eq.s32.totalorder %s17, 1
      %p68 = por %p66, %p67
      %p69 = scmp.ne.s32.totalorder %s60, %s61
      %p70 = scmp.eq.s32.totalorder %s17, 0
      %p71 = por %p69, %p70
      %p72 = scmp.ne.s32.totalorder %s60, %s61
      %p73 = scmp.eq.s32.totalorder %s18, 1
      %p74 = por %p72, %p73
      %p76 = scmp.ne.s32.totalorder %s61, %s75
      %p77 = scmp.eq.s32.totalorder %s18, 0
      %p78 = por %p76, %p77
      %s80 = sadd.s32 %s79, 1
      %p83 = scmp.eq.s32.totalorder %s12, 1
      %p84 = scmp.ne.s32.totalorder %s79, %s81
      %p85 = scmp.eq.s32.totalorder %s12, 0
      %p86 = por %p84, %p85
      %p87 = scmp.ne.s32.totalorder %s79, %s81
      %p88 = scmp.eq.s32.totalorder %s17, 1
      %p89 = por %p87, %p88
      %p90 = scmp.ne.s32.totalorder %s81, %s82
      %p91 = scmp.eq.s32.totalorder %s17, 0
      %p92 = por %p90, %p91
      %p93 = scmp.ne.s32.totalorder %s81, %s82
      %p94 = scmp.eq.s32.totalorder %s18, 1
      %p95 = por %p93, %p94
      %p97 = scmp.ne.s32.totalorder %s82, %s96
      %p98 = scmp.eq.s32.totalorder %s18, 0
      %p99 = por %p97, %p98
      %s100 = ssub.s32 %s19, %s31
      %s101 = ssub.s32 %s20, %s27
      %s102 = sor.u32 %s100, %s101
      %p103 = scmp.eq.s32.totalorder %s102, 0
      %s105 = sadd.s32 %s104, 1
      %s106 = scalar_select %p103, %s104, %s105
      %p109 = pneg %p103
      %p110 = scmp.eq.s32.totalorder %s12, 1
      %p111 = por %p109, %p110
      %p112 = scmp.ne.s32.totalorder %s104, %s107
      %p113 = scmp.eq.s32.totalorder %s12, 0
      %p114 = por %p112, %p113
      %p115 = scmp.ne.s32.totalorder %s104, %s107
      %p116 = scmp.eq.s32.totalorder %s17, 1
      %p117 = por %p115, %p116
      %p118 = scmp.ne.s32.totalorder %s107, %s108
      %p119 = scmp.eq.s32.totalorder %s17, 0
      %p120 = por %p118, %p119
      %p121 = scmp.ne.s32.totalorder %s107, %s108
      %p122 = scmp.eq.s32.totalorder %s18, 1
      %p123 = por %p121, %p122
      %p125 = scmp.ne.s32.totalorder %s108, %s124
      %p126 = scmp.eq.s32.totalorder %s18, 0
      %p127 = por %p125, %p126
      %p128 = scmp.le.s32.totalorder 1, %s12
      %p129 = scmp.lt.s32.totalorder %s12, 3
      %p130 = pnand %p128, %p129
      %p131 = pneg %p130
      // Predicated region
      $region9: #{tpu_custom_call.1} parent=5 // pred_check
        _
      $region10: #{tpu_custom_call.1} parent=5 // pred_check_branch
        %133 = sbr.rel (%p130) target = $region12
      $region11: #{tpu_custom_call.1} parent=5 // pred_region
        %s134 = ssub.s32 %s12, 1
        // Predicated region
        $region13: #{tpu_custom_call.1} parent=11 // pred_check
          %p135 = pneg %p71
        $region14: #{tpu_custom_call.1} parent=11 // pred_check_branch
          %137 = sbr.rel (%p135) target = $region16
        $region15: #{tpu_custom_call.1} parent=11 // pred_region
          _
        $region16: #{tpu_custom_call.1} parent=11 // pred_fallthru
          _
        // Predicated region
        $region17: #{tpu_custom_call.1} parent=11 // pred_check
          %p138 = pneg %p92
        $region18: #{tpu_custom_call.1} parent=11 // pred_check_branch
          %140 = sbr.rel (%p138) target = $region20
        $region19: #{tpu_custom_call.1} parent=11 // pred_region
          _
        $region20: #{tpu_custom_call.1} parent=11 // pred_fallthru
          _
      $region12: #{tpu_custom_call.1} parent=5 // pred_fallthru
        _
      %p141 = scmp.lt.s32.totalorder %s12, 2
      // Predicated region
      $region21: #{tpu_custom_call.1} parent=5 // pred_check
        %p142 = pneg %p141
      $region22: #{tpu_custom_call.1} parent=5 // pred_check_branch
        %144 = sbr.rel (%p142) target = $region24
      $region23: #{tpu_custom_call.1} parent=5 // pred_region
        // Predicated region
        $region25: #{tpu_custom_call.1} parent=23 // pred_check
          %p145 = pneg %p44
        $region26: #{tpu_custom_call.1} parent=23 // pred_check_branch
          %147 = sbr.rel (%p145) target = $region28
        $region27: #{tpu_custom_call.1} parent=23 // pred_region
          %p148 = scmp.lt.s32.totalorder %s19, 1
          %s149 = scalar_select %p148, %s19, 1
          %s150 = smul.addr %s149, 4
          %s151 = smul.addr %s150, 4
          %s152 = scalar_lea.vmem %s0, %s151
        $region28: #{tpu_custom_call.1} parent=23 // pred_fallthru
          _
      $region24: #{tpu_custom_call.1} parent=5 // pred_fallthru
        _
      %p153 = scmp.le.s32.totalorder 1, %s12
      %p154 = scmp.lt.s32.totalorder %s12, 3
      %p155 = pnand %p153, %p154
      %p156 = pneg %p155
      // Predicated region
      $region29: #{tpu_custom_call.1} parent=5 // pred_check
        _
      $region30: #{tpu_custom_call.1} parent=5 // pred_check_branch
        %158 = sbr.rel (%p155) target = $region32
      $region31: #{tpu_custom_call.1} parent=5 // pred_region
        %s159 = ssub.s32 %s12, 1
        %p160 = scmp.lt.s32.totalorder %s21, 1
        %s161 = scalar_select %p160, %s21, 1
        %s162 = smul.addr %s161, 4
        %s163 = smul.addr %s162, 4
        %s164 = scalar_lea.vmem %s0, %s163
        %p165 = pneg %p50
        %p166 = pneg %p47
        %p167 = pneg %p71
        %p168 = pneg %p68
        %p169 = pneg %p92
        %p170 = pneg %p89
        %p171 = pneg %p120
        %p172 = pneg %p117
        %s173 = sand.u32 %s107, 1
        %s174 = scalar_lea.sflag [#allocation3], %s173
        %s175 = sand.u32 %s107, 1
        %s176 = smul.addr %s175, 24
        %s177 = scalar_lea.vmem [#allocation2], %s176
        %p178 = scmp.lt.s32.totalorder %s21, 1
        %s179 = scalar_select %p178, %s21, 1
        %s180 = smul.addr %s179, 4
        %s181 = smul.addr %s180, 4
        %s182 = scalar_lea.vmem %s0, %s181
        %s183 = smul.u32 3, %s22
        %v184 = vld [vmem:[%s182] sm:$0xff]
        %v185 = vld [vmem:[%s182 + $0x8] sm:$0xff]
        %v186 = vld [vmem:[%s1] sm:$0xff]
        %s187 = scalar_lea.vmem %s1, 8
        %v188 = vld [vmem:[%s187] sm:$0xff]
        %v191 = vcombine.high %v184, %v184
        %v192 = vcombine.high %v185, %v185
        %193 = vrot.lane.b32.xlu0 %v184, 127
        %v194 = vpop.permute.xlu0 %193
        %195 = vrot.lane.b32.xlu0 %v191, 127
        %v196 = vpop.permute.xlu0 %195
        %197 = vrot.lane.b32.xlu0 %v185, 127
        %v198 = vpop.permute.xlu0 %197
        %199 = vrot.lane.b32.xlu0 %v192, 127
        %v200 = vpop.permute.xlu0 %199
        %vm201 = vcmask 1039360
        %v202 = vsel %vm201, %v194, %v196
        %v203 = vsel %vm201, %v196, %v198
        %v204 = vsel %vm201, %v198, %v200
        %vm205 = vcmask 31744
        %v207 = vsel %vm205, %v188, 0
        %vm209 = vcmask 1043456
        %v210 = vsel %vm209, %v202, 0
        %v212 = vsel %vm209, %v203, 0
        %v214 = vsel %vm209, %v204, 0
        %216 = vmatprep.subr.mxu0 0.0
        %217 = vmatpush1.msra.mxu0 0.0
        %218 = vmatprep.subr.mxu0 0.0
        %219 = vmatpush1.msra.mxu0 0.0
        %220 = vmatprep.subr.mxu0 0.0
        %221 = vmatpush1.msra.mxu0 0.0
        %222 = vmatprep.subr.mxu0 0.0
        %223 = vmatpush1.msra.mxu0 0.0
        %224 = vmatprep.subr.mxu0 0.0
        %225 = vmatpush1.msra.mxu0 0.0
        %226 = vmatprep.subr.mxu0 0.0
        %227 = vmatpush1.msra.mxu0 0.0
        %228 = vmatprep.subr.mxu0 0.0
        %229 = vmatpush1.msra.mxu0 0.0
        %230 = vmatprep.subr.mxu0 0.0
        %231 = vmatpush1.msra.mxu0 0.0
        %232 = vmatprep.subr.mxu0 0.0
        %233 = vmatpush1.msra.mxu0 0.0
        %234 = vmatprep.subr.mxu0 0.0
        %235 = vmatpush1.msra.mxu0 0.0
        %236 = vmatprep.subr.mxu0 0.0
        %237 = vmatpush1.msra.mxu0 0.0
        %238 = vmatprep.subr.mxu0 0.0
        %239 = vmatpush1.msra.mxu0 0.0
        %240 = vmatprep.subr.mxu0 0.0
        %241 = vmatpush1.msra.mxu0 0.0
        %242 = vmatprep.subr.mxu0 0.0
        %243 = vmatpush1.msra.mxu0 0.0
        %244 = vmatprep.subr.mxu0 0.0
        %245 = vmatpush1.msra.mxu0 0.0
        %246 = vmatprep.subr.mxu0 %v212
        %247 = vmatpush1.msra.mxu0 %v210
        %248 = vmatprep.subr.mxu0 0.0
        %249 = vmatpush2.msra.mxu0 0.0
        %250 = vmatprep.subr.mxu0 0.0
        %251 = vmatpush2.msra.mxu0 0.0
        %252 = vmatprep.subr.mxu0 0.0
        %253 = vmatpush2.msra.mxu0 0.0
        %254 = vmatprep.subr.mxu0 0.0
        %255 = vmatpush2.msra.mxu0 0.0
        %256 = vmatprep.subr.mxu0 0.0
        %257 = vmatpush2.msra.mxu0 0.0
        %258 = vmatprep.subr.mxu0 0.0
        %259 = vmatpush2.msra.mxu0 0.0
        %260 = vmatprep.subr.mxu0 0.0
        %261 = vmatpush2.msra.mxu0 0.0
        %262 = vmatprep.subr.mxu0 0.0
        %263 = vmatpush2.msra.mxu0 0.0
        %264 = vmatprep.subr.mxu0 0.0
        %265 = vmatpush2.msra.mxu0 0.0
        %266 = vmatprep.subr.mxu0 0.0
        %267 = vmatpush2.msra.mxu0 0.0
        %268 = vmatprep.subr.mxu0 0.0
        %269 = vmatpush2.msra.mxu0 0.0
        %270 = vmatprep.subr.mxu0 0.0
        %271 = vmatpush2.msra.mxu0 0.0
        %272 = vmatprep.subr.mxu0 0.0
        %273 = vmatpush2.msra.mxu0 0.0
        %274 = vmatprep.subr.mxu0 0.0
        %275 = vmatpush2.msra.mxu0 0.0
        %276 = vmatprep.subr.mxu0 0.0
        %277 = vmatpush2.msra.mxu0 0.0
        %278 = vmatprep.subr.mxu0 0.0
        %279 = vmatpush2.msra.mxu0 0.0
        %280 = vmatprep.mubr.f32.mxu0 0.0
        %281 = vmatmul.mubr.f32.gmra.mxu0 %v207
        %v282 = vpop.f32.mrf.mxu0
        %v283 = vadd.f32 0.0, %v282
        %v284 = vpop.f32.mrf.mxu0
        %v285 = vadd.f32 0.0, %v284
        %286 = vdwg.mxu0
        %287 = vmatprep.subr.mxu0 0.0
        %288 = vmatpush1.msra.mxu0 0.0
        %289 = vmatprep.subr.mxu0 0.0
        %290 = vmatpush1.msra.mxu0 0.0
        %291 = vmatprep.subr.mxu0 0.0
        %292 = vmatpush1.msra.mxu0 0.0
        %293 = vmatprep.subr.mxu0 0.0
        %294 = vmatpush1.msra.mxu0 0.0
        %295 = vmatprep.subr.mxu0 0.0
        %296 = vmatpush1.msra.mxu0 0.0
        %297 = vmatprep.subr.mxu0 0.0
        %298 = vmatpush1.msra.mxu0 0.0
        %299 = vmatprep.subr.mxu0 0.0
        %300 = vmatpush1.msra.mxu0 0.0
        %301 = vmatprep.subr.mxu0 0.0
        %302 = vmatpush1.msra.mxu0 0.0
        %303 = vmatprep.subr.mxu0 0.0
        %304 = vmatpush1.msra.mxu0 0.0
        %305 = vmatprep.subr.mxu0 0.0
        %306 = vmatpush1.msra.mxu0 0.0
        %307 = vmatprep.subr.mxu0 0.0
        %308 = vmatpush1.msra.mxu0 0.0
        %309 = vmatprep.subr.mxu0 0.0
        %310 = vmatpush1.msra.mxu0 0.0
        %311 = vmatprep.subr.mxu0 0.0
        %312 = vmatpush1.msra.mxu0 0.0
        %313 = vmatprep.subr.mxu0 0.0
        %314 = vmatpush1.msra.mxu0 0.0
        %315 = vmatprep.subr.mxu0 0.0
        %316 = vmatpush1.msra.mxu0 0.0
        %317 = vmatprep.subr.mxu0 0.0
        %318 = vmatpush1.msra.mxu0 %v214
        %319 = vmatprep.subr.mxu0 0.0
        %320 = vmatpush2.msra.mxu0 0.0
        %321 = vmatprep.subr.mxu0 0.0
        %322 = vmatpush2.msra.mxu0 0.0
        %323 = vmatprep.subr.mxu0 0.0
        %324 = vmatpush2.msra.mxu0 0.0
        %325 = vmatprep.subr.mxu0 0.0
        %326 = vmatpush2.msra.mxu0 0.0
        %327 = vmatprep.subr.mxu0 0.0
        %328 = vmatpush2.msra.mxu0 0.0
        %329 = vmatprep.subr.mxu0 0.0
        %330 = vmatpush2.msra.mxu0 0.0
        %331 = vmatprep.subr.mxu0 0.0
        %332 = vmatpush2.msra.mxu0 0.0
        %333 = vmatprep.subr.mxu0 0.0
        %334 = vmatpush2.msra.mxu0 0.0
        %335 = vmatprep.subr.mxu0 0.0
        %336 = vmatpush2.msra.mxu0 0.0
        %337 = vmatprep.subr.mxu0 0.0
        %338 = vmatpush2.msra.mxu0 0.0
        %339 = vmatprep.subr.mxu0 0.0
        %340 = vmatpush2.msra.mxu0 0.0
        %341 = vmatprep.subr.mxu0 0.0
        %342 = vmatpush2.msra.mxu0 0.0
        %343 = vmatprep.subr.mxu0 0.0
        %344 = vmatpush2.msra.mxu0 0.0
        %345 = vmatprep.subr.mxu0 0.0
        %346 = vmatpush2.msra.mxu0 0.0
        %347 = vmatprep.subr.mxu0 0.0
        %348 = vmatpush2.msra.mxu0 0.0
        %349 = vmatprep.subr.mxu0 0.0
        %350 = vmatpush2.msra.mxu0 0.0
        %351 = vmatprep.mubr.f32.mxu0 0.0
        %352 = vmatmul.mubr.f32.gmra.mxu0 %v207
        %v353 = vpop.f32.mrf.mxu0
        %v354 = vadd.f32 0.0, %v353
        %v355 = vpop.f32.mrf.mxu0
        %356 = vdwg.mxu0
        %v358 = vsel %vm205, %v186, 0
        %v360 = vsel %vm209, %v184, 0
        %v362 = vsel %vm209, %v191, 0
        %v364 = vsel %vm209, %v185, 0
        %366 = vmatprep.subr.mxu0 0.0
        %367 = vmatpush1.msra.mxu0 0.0
        %368 = vmatprep.subr.mxu0 0.0
        %369 = vmatpush1.msra.mxu0 0.0
        %370 = vmatprep.subr.mxu0 0.0
        %371 = vmatpush1.msra.mxu0 0.0
        %372 = vmatprep.subr.mxu0 0.0
        %373 = vmatpush1.msra.mxu0 0.0
        %374 = vmatprep.subr.mxu0 0.0
        %375 = vmatpush1.msra.mxu0 0.0
        %376 = vmatprep.subr.mxu0 0.0
        %377 = vmatpush1.msra.mxu0 0.0
        %378 = vmatprep.subr.mxu0 0.0
        %379 = vmatpush1.msra.mxu0 0.0
        %380 = vmatprep.subr.mxu0 0.0
        %381 = vmatpush1.msra.mxu0 0.0
        %382 = vmatprep.subr.mxu0 0.0
        %383 = vmatpush1.msra.mxu0 0.0
        %384 = vmatprep.subr.mxu0 0.0
        %385 = vmatpush1.msra.mxu0 0.0
        %386 = vmatprep.subr.mxu0 0.0
        %387 = vmatpush1.msra.mxu0 0.0
        %388 = vmatprep.subr.mxu0 0.0
        %389 = vmatpush1.msra.mxu0 0.0
        %390 = vmatprep.subr.mxu0 0.0
        %391 = vmatpush1.msra.mxu0 0.0
        %392 = vmatprep.subr.mxu0 0.0
        %393 = vmatpush1.msra.mxu0 0.0
        %394 = vmatprep.subr.mxu0 0.0
        %395 = vmatpush1.msra.mxu0 0.0
        %396 = vmatprep.subr.mxu0 %v362
        %397 = vmatpush1.msra.mxu0 %v360
        %398 = vmatprep.subr.mxu0 0.0
        %399 = vmatpush2.msra.mxu0 0.0
        %400 = vmatprep.subr.mxu0 0.0
        %401 = vmatpush2.msra.mxu0 0.0
        %402 = vmatprep.subr.mxu0 0.0
        %403 = vmatpush2.msra.mxu0 0.0
        %404 = vmatprep.subr.mxu0 0.0
        %405 = vmatpush2.msra.mxu0 0.0
        %406 = vmatprep.subr.mxu0 0.0
        %407 = vmatpush2.msra.mxu0 0.0
        %408 = vmatprep.subr.mxu0 0.0
        %409 = vmatpush2.msra.mxu0 0.0
        %410 = vmatprep.subr.mxu0 0.0
        %411 = vmatpush2.msra.mxu0 0.0
        %412 = vmatprep.subr.mxu0 0.0
        %413 = vmatpush2.msra.mxu0 0.0
        %414 = vmatprep.subr.mxu0 0.0
        %415 = vmatpush2.msra.mxu0 0.0
        %416 = vmatprep.subr.mxu0 0.0
        %417 = vmatpush2.msra.mxu0 0.0
        %418 = vmatprep.subr.mxu0 0.0
        %419 = vmatpush2.msra.mxu0 0.0
        %420 = vmatprep.subr.mxu0 0.0
        %421 = vmatpush2.msra.mxu0 0.0
        %422 = vmatprep.subr.mxu0 0.0
        %423 = vmatpush2.msra.mxu0 0.0
        %424 = vmatprep.subr.mxu0 0.0
        %425 = vmatpush2.msra.mxu0 0.0
        %426 = vmatprep.subr.mxu0 0.0
        %427 = vmatpush2.msra.mxu0 0.0
        %428 = vmatprep.subr.mxu0 0.0
        %429 = vmatpush2.msra.mxu0 0.0
        %430 = vmatprep.mubr.f32.mxu0 0.0
        %431 = vmatmul.mubr.f32.gmra.mxu0 %v358
        %v432 = vpop.f32.mrf.mxu0
        %v433 = vadd.f32 %v283, %v432
        %v434 = vpop.f32.mrf.mxu0
        %v435 = vadd.f32 %v285, %v434
        %436 = vdwg.mxu0
        %437 = vmatprep.subr.mxu0 0.0
        %438 = vmatpush1.msra.mxu0 0.0
        %439 = vmatprep.subr.mxu0 0.0
        %440 = vmatpush1.msra.mxu0 0.0
        %441 = vmatprep.subr.mxu0 0.0
        %442 = vmatpush1.msra.mxu0 0.0
        %443 = vmatprep.subr.mxu0 0.0
        %444 = vmatpush1.msra.mxu0 0.0
        %445 = vmatprep.subr.mxu0 0.0
        %446 = vmatpush1.msra.mxu0 0.0
        %447 = vmatprep.subr.mxu0 0.0
        %448 = vmatpush1.msra.mxu0 0.0
        %449 = vmatprep.subr.mxu0 0.0
        %450 = vmatpush1.msra.mxu0 0.0
        %451 = vmatprep.subr.mxu0 0.0
        %452 = vmatpush1.msra.mxu0 0.0
        %453 = vmatprep.subr.mxu0 0.0
        %454 = vmatpush1.msra.mxu0 0.0
        %455 = vmatprep.subr.mxu0 0.0
        %456 = vmatpush1.msra.mxu0 0.0
        %457 = vmatprep.subr.mxu0 0.0
        %458 = vmatpush1.msra.mxu0 0.0
        %459 = vmatprep.subr.mxu0 0.0
        %460 = vmatpush1.msra.mxu0 0.0
        %461 = vmatprep.subr.mxu0 0.0
        %462 = vmatpush1.msra.mxu0 0.0
        %463 = vmatprep.subr.mxu0 0.0
        %464 = vmatpush1.msra.mxu0 0.0
        %465 = vmatprep.subr.mxu0 0.0
        %466 = vmatpush1.msra.mxu0 0.0
        %467 = vmatprep.subr.mxu0 0.0
        %468 = vmatpush1.msra.mxu0 %v364
        %469 = vmatprep.subr.mxu0 0.0
        %470 = vmatpush2.msra.mxu0 0.0
        %471 = vmatprep.subr.mxu0 0.0
        %472 = vmatpush2.msra.mxu0 0.0
        %473 = vmatprep.subr.mxu0 0.0
        %474 = vmatpush2.msra.mxu0 0.0
        %475 = vmatprep.subr.mxu0 0.0
        %476 = vmatpush2.msra.mxu0 0.0
        %477 = vmatprep.subr.mxu0 0.0
        %478 = vmatpush2.msra.mxu0 0.0
        %479 = vmatprep.subr.mxu0 0.0
        %480 = vmatpush2.msra.mxu0 0.0
        %481 = vmatprep.subr.mxu0 0.0
        %482 = vmatpush2.msra.mxu0 0.0
        %483 = vmatprep.subr.mxu0 0.0
        %484 = vmatpush2.msra.mxu0 0.0
        %485 = vmatprep.subr.mxu0 0.0
        %486 = vmatpush2.msra.mxu0 0.0
        %487 = vmatprep.subr.mxu0 0.0
        %488 = vmatpush2.msra.mxu0 0.0
        %489 = vmatprep.subr.mxu0 0.0
        %490 = vmatpush2.msra.mxu0 0.0
        %491 = vmatprep.subr.mxu0 0.0
        %492 = vmatpush2.msra.mxu0 0.0
        %493 = vmatprep.subr.mxu0 0.0
        %494 = vmatpush2.msra.mxu0 0.0
        %495 = vmatprep.subr.mxu0 0.0
        %496 = vmatpush2.msra.mxu0 0.0
        %497 = vmatprep.subr.mxu0 0.0
        %498 = vmatpush2.msra.mxu0 0.0
        %499 = vmatprep.subr.mxu0 0.0
        %500 = vmatpush2.msra.mxu0 0.0
        %501 = vmatprep.mubr.f32.mxu0 0.0
        %502 = vmatmul.mubr.f32.gmra.mxu0 %v358
        %v503 = vpop.f32.mrf.mxu0
        %v504 = vadd.f32 %v354, %v503
        %v505 = vpop.f32.mrf.mxu0
        %506 = vdwg.mxu0
        %s507 = scalar_lea.vmem %s1, 16
        %v508 = vld [vmem:[%s507] sm:$0xff]
        %509 = vrot.lane.b32.xlu0 %v184, 126
        %v510 = vpop.permute.xlu0 %509
        %511 = vrot.lane.b32.xlu0 %v191, 126
        %v512 = vpop.permute.xlu0 %511
        %513 = vrot.lane.b32.xlu0 %v185, 126
        %v514 = vpop.permute.xlu0 %513
        %515 = vrot.lane.b32.xlu0 %v192, 126
        %v516 = vpop.permute.xlu0 %515
        %vm517 = vcmask 1031168
        %v518 = vsel %vm517, %v510, %v512
        %v519 = vsel %vm517, %v512, %v514
        %v520 = vsel %vm517, %v514, %v516
        %v522 = vsel %vm205, %v508, 0
        %v524 = vsel %vm209, %v518, 0
        %v526 = vsel %vm209, %v519, 0
        %v528 = vsel %vm209, %v520, 0
        %530 = vmatprep.subr.mxu0 0.0
        %531 = vmatpush1.msra.mxu0 0.0
        %532 = vmatprep.subr.mxu0 0.0
        %533 = vmatpush1.msra.mxu0 0.0
        %534 = vmatprep.subr.mxu0 0.0
        %535 = vmatpush1.msra.mxu0 0.0
        %536 = vmatprep.subr.mxu0 0.0
        %537 = vmatpush1.msra.mxu0 0.0
        %538 = vmatprep.subr.mxu0 0.0
        %539 = vmatpush1.msra.mxu0 0.0
        %540 = vmatprep.subr.mxu0 0.0
        %541 = vmatpush1.msra.mxu0 0.0
        %542 = vmatprep.subr.mxu0 0.0
        %543 = vmatpush1.msra.mxu0 0.0
        %544 = vmatprep.subr.mxu0 0.0
        %545 = vmatpush1.msra.mxu0 0.0
        %546 = vmatprep.subr.mxu0 0.0
        %547 = vmatpush1.msra.mxu0 0.0
        %548 = vmatprep.subr.mxu0 0.0
        %549 = vmatpush1.msra.mxu0 0.0
        %550 = vmatprep.subr.mxu0 0.0
        %551 = vmatpush1.msra.mxu0 0.0
        %552 = vmatprep.subr.mxu0 0.0
        %553 = vmatpush1.msra.mxu0 0.0
        %554 = vmatprep.subr.mxu0 0.0
        %555 = vmatpush1.msra.mxu0 0.0
        %556 = vmatprep.subr.mxu0 0.0
        %557 = vmatpush1.msra.mxu0 0.0
        %558 = vmatprep.subr.mxu0 0.0
        %559 = vmatpush1.msra.mxu0 0.0
        %560 = vmatprep.subr.mxu0 %v526
        %561 = vmatpush1.msra.mxu0 %v524
        %562 = vmatprep.subr.mxu0 0.0
        %563 = vmatpush2.msra.mxu0 0.0
        %564 = vmatprep.subr.mxu0 0.0
        %565 = vmatpush2.msra.mxu0 0.0
        %566 = vmatprep.subr.mxu0 0.0
        %567 = vmatpush2.msra.mxu0 0.0
        %568 = vmatprep.subr.mxu0 0.0
        %569 = vmatpush2.msra.mxu0 0.0
        %570 = vmatprep.subr.mxu0 0.0
        %571 = vmatpush2.msra.mxu0 0.0
        %572 = vmatprep.subr.mxu0 0.0
        %573 = vmatpush2.msra.mxu0 0.0
        %574 = vmatprep.subr.mxu0 0.0
        %575 = vmatpush2.msra.mxu0 0.0
        %576 = vmatprep.subr.mxu0 0.0
        %577 = vmatpush2.msra.mxu0 0.0
        %578 = vmatprep.subr.mxu0 0.0
        %579 = vmatpush2.msra.mxu0 0.0
        %580 = vmatprep.subr.mxu0 0.0
        %581 = vmatpush2.msra.mxu0 0.0
        %582 = vmatprep.subr.mxu0 0.0
        %583 = vmatpush2.msra.mxu0 0.0
        %584 = vmatprep.subr.mxu0 0.0
        %585 = vmatpush2.msra.mxu0 0.0
        %586 = vmatprep.subr.mxu0 0.0
        %587 = vmatpush2.msra.mxu0 0.0
        %588 = vmatprep.subr.mxu0 0.0
        %589 = vmatpush2.msra.mxu0 0.0
        %590 = vmatprep.subr.mxu0 0.0
        %591 = vmatpush2.msra.mxu0 0.0
        %592 = vmatprep.subr.mxu0 0.0
        %593 = vmatpush2.msra.mxu0 0.0
        %594 = vmatprep.mubr.f32.mxu0 0.0
        %595 = vmatmul.mubr.f32.gmra.mxu0 %v522
        %v596 = vpop.f32.mrf.mxu0
        %v597 = vadd.f32 0.0, %v596
        %v598 = vpop.f32.mrf.mxu0
        %v599 = vadd.f32 0.0, %v598
        %600 = vdwg.mxu0
        %601 = vmatprep.subr.mxu0 0.0
        %602 = vmatpush1.msra.mxu0 0.0
        %603 = vmatprep.subr.mxu0 0.0
        %604 = vmatpush1.msra.mxu0 0.0
        %605 = vmatprep.subr.mxu0 0.0
        %606 = vmatpush1.msra.mxu0 0.0
        %607 = vmatprep.subr.mxu0 0.0
        %608 = vmatpush1.msra.mxu0 0.0
        %609 = vmatprep.subr.mxu0 0.0
        %610 = vmatpush1.msra.mxu0 0.0
        %611 = vmatprep.subr.mxu0 0.0
        %612 = vmatpush1.msra.mxu0 0.0
        %613 = vmatprep.subr.mxu0 0.0
        %614 = vmatpush1.msra.mxu0 0.0
        %615 = vmatprep.subr.mxu0 0.0
        %616 = vmatpush1.msra.mxu0 0.0
        %617 = vmatprep.subr.mxu0 0.0
        %618 = vmatpush1.msra.mxu0 0.0
        %619 = vmatprep.subr.mxu0 0.0
        %620 = vmatpush1.msra.mxu0 0.0
        %621 = vmatprep.subr.mxu0 0.0
        %622 = vmatpush1.msra.mxu0 0.0
        %623 = vmatprep.subr.mxu0 0.0
        %624 = vmatpush1.msra.mxu0 0.0
        %625 = vmatprep.subr.mxu0 0.0
        %626 = vmatpush1.msra.mxu0 0.0
        %627 = vmatprep.subr.mxu0 0.0
        %628 = vmatpush1.msra.mxu0 0.0
        %629 = vmatprep.subr.mxu0 0.0
        %630 = vmatpush1.msra.mxu0 0.0
        %631 = vmatprep.subr.mxu0 0.0
        %632 = vmatpush1.msra.mxu0 %v528
        %633 = vmatprep.subr.mxu0 0.0
        %634 = vmatpush2.msra.mxu0 0.0
        %635 = vmatprep.subr.mxu0 0.0
        %636 = vmatpush2.msra.mxu0 0.0
        %637 = vmatprep.subr.mxu0 0.0
        %638 = vmatpush2.msra.mxu0 0.0
        %639 = vmatprep.subr.mxu0 0.0
        %640 = vmatpush2.msra.mxu0 0.0
        %641 = vmatprep.subr.mxu0 0.0
        %642 = vmatpush2.msra.mxu0 0.0
        %643 = vmatprep.subr.mxu0 0.0
        %644 = vmatpush2.msra.mxu0 0.0
        %645 = vmatprep.subr.mxu0 0.0
        %646 = vmatpush2.msra.mxu0 0.0
        %647 = vmatprep.subr.mxu0 0.0
        %648 = vmatpush2.msra.mxu0 0.0
        %649 = vmatprep.subr.mxu0 0.0
        %650 = vmatpush2.msra.mxu0 0.0
        %651 = vmatprep.subr.mxu0 0.0
        %652 = vmatpush2.msra.mxu0 0.0
        %653 = vmatprep.subr.mxu0 0.0
        %654 = vmatpush2.msra.mxu0 0.0
        %655 = vmatprep.subr.mxu0 0.0
        %656 = vmatpush2.msra.mxu0 0.0
        %657 = vmatprep.subr.mxu0 0.0
        %658 = vmatpush2.msra.mxu0 0.0
        %659 = vmatprep.subr.mxu0 0.0
        %660 = vmatpush2.msra.mxu0 0.0
        %661 = vmatprep.subr.mxu0 0.0
        %662 = vmatpush2.msra.mxu0 0.0
        %663 = vmatprep.subr.mxu0 0.0
        %664 = vmatpush2.msra.mxu0 0.0
        %665 = vmatprep.mubr.f32.mxu0 0.0
        %666 = vmatmul.mubr.f32.gmra.mxu0 %v522
        %v667 = vpop.f32.mrf.mxu0
        %v668 = vadd.f32 0.0, %v667
        %v669 = vpop.f32.mrf.mxu0
        %670 = vdwg.mxu0
        %v671 = vadd.f32 %v433, %v597
        %v672 = vadd.f32 %v435, %v599
        %v673 = vadd.f32 %v504, %v668
        %s674 = scalar_lea.vmem %s1, 24
        %v675 = vld [vmem:[%s674] sm:$0xff]
        %676 = vrot.lane.b32.xlu0 %v184, 110
        %v677 = vpop.permute.xlu0 %676
        %678 = vrot.lane.b32.xlu0 %v191, 110
        %v679 = vpop.permute.xlu0 %678
        %680 = vrot.lane.b32.xlu0 %v185, 110
        %v681 = vpop.permute.xlu0 %680
        %682 = vrot.lane.b32.xlu0 %v192, 110
        %v683 = vpop.permute.xlu0 %682
        %vm684 = vcmask 900096
        %v685 = vsel %vm684, %v677, %v679
        %v686 = vsel %vm684, %v679, %v681
        %v687 = vsel %vm684, %v681, %v683
        %v689 = vsel %vm205, %v675, 0
        %v691 = vsel %vm209, %v685, 0
        %v693 = vsel %vm209, %v686, 0
        %v695 = vsel %vm209, %v687, 0
        %697 = vmatprep.subr.mxu0 0.0
        %698 = vmatpush1.msra.mxu0 0.0
        %699 = vmatprep.subr.mxu0 0.0
        %700 = vmatpush1.msra.mxu0 0.0
        %701 = vmatprep.subr.mxu0 0.0
        %702 = vmatpush1.msra.mxu0 0.0
        %703 = vmatprep.subr.mxu0 0.0
        %704 = vmatpush1.msra.mxu0 0.0
        %705 = vmatprep.subr.mxu0 0.0
        %706 = vmatpush1.msra.mxu0 0.0
        %707 = vmatprep.subr.mxu0 0.0
        %708 = vmatpush1.msra.mxu0 0.0
        %709 = vmatprep.subr.mxu0 0.0
        %710 = vmatpush1.msra.mxu0 0.0
        %711 = vmatprep.subr.mxu0 0.0
        %712 = vmatpush1.msra.mxu0 0.0
        %713 = vmatprep.subr.mxu0 0.0
        %714 = vmatpush1.msra.mxu0 0.0
        %715 = vmatprep.subr.mxu0 0.0
        %716 = vmatpush1.msra.mxu0 0.0
        %717 = vmatprep.subr.mxu0 0.0
        %718 = vmatpush1.msra.mxu0 0.0
        %719 = vmatprep.subr.mxu0 0.0
        %720 = vmatpush1.msra.mxu0 0.0
        %721 = vmatprep.subr.mxu0 0.0
        %722 = vmatpush1.msra.mxu0 0.0
        %723 = vmatprep.subr.mxu0 0.0
        %724 = vmatpush1.msra.mxu0 0.0
        %725 = vmatprep.subr.mxu0 0.0
        %726 = vmatpush1.msra.mxu0 0.0
        %727 = vmatprep.subr.mxu0 %v693
        %728 = vmatpush1.msra.mxu0 %v691
        %729 = vmatprep.subr.mxu0 0.0
        %730 = vmatpush2.msra.mxu0 0.0
        %731 = vmatprep.subr.mxu0 0.0
        %732 = vmatpush2.msra.mxu0 0.0
        %733 = vmatprep.subr.mxu0 0.0
        %734 = vmatpush2.msra.mxu0 0.0
        %735 = vmatprep.subr.mxu0 0.0
        %736 = vmatpush2.msra.mxu0 0.0
        %737 = vmatprep.subr.mxu0 0.0
        %738 = vmatpush2.msra.mxu0 0.0
        %739 = vmatprep.subr.mxu0 0.0
        %740 = vmatpush2.msra.mxu0 0.0
        %741 = vmatprep.subr.mxu0 0.0
        %742 = vmatpush2.msra.mxu0 0.0
        %743 = vmatprep.subr.mxu0 0.0
        %744 = vmatpush2.msra.mxu0 0.0
        %745 = vmatprep.subr.mxu0 0.0
        %746 = vmatpush2.msra.mxu0 0.0
        %747 = vmatprep.subr.mxu0 0.0
        %748 = vmatpush2.msra.mxu0 0.0
        %749 = vmatprep.subr.mxu0 0.0
        %750 = vmatpush2.msra.mxu0 0.0
        %751 = vmatprep.subr.mxu0 0.0
        %752 = vmatpush2.msra.mxu0 0.0
        %753 = vmatprep.subr.mxu0 0.0
        %754 = vmatpush2.msra.mxu0 0.0
        %755 = vmatprep.subr.mxu0 0.0
        %756 = vmatpush2.msra.mxu0 0.0
        %757 = vmatprep.subr.mxu0 0.0
        %758 = vmatpush2.msra.mxu0 0.0
        %759 = vmatprep.subr.mxu0 0.0
        %760 = vmatpush2.msra.mxu0 0.0
        %761 = vmatprep.mubr.f32.mxu0 0.0
        %762 = vmatmul.mubr.f32.gmra.mxu0 %v689
        %v763 = vpop.f32.mrf.mxu0
        %v764 = vadd.f32 0.0, %v763
        %v765 = vpop.f32.mrf.mxu0
        %v766 = vadd.f32 0.0, %v765
        %767 = vdwg.mxu0
        %768 = vmatprep.subr.mxu0 0.0
        %769 = vmatpush1.msra.mxu0 0.0
        %770 = vmatprep.subr.mxu0 0.0
        %771 = vmatpush1.msra.mxu0 0.0
        %772 = vmatprep.subr.mxu0 0.0
        %773 = vmatpush1.msra.mxu0 0.0
        %774 = vmatprep.subr.mxu0 0.0
        %775 = vmatpush1.msra.mxu0 0.0
        %776 = vmatprep.subr.mxu0 0.0
        %777 = vmatpush1.msra.mxu0 0.0
        %778 = vmatprep.subr.mxu0 0.0
        %779 = vmatpush1.msra.mxu0 0.0
        %780 = vmatprep.subr.mxu0 0.0
        %781 = vmatpush1.msra.mxu0 0.0
        %782 = vmatprep.subr.mxu0 0.0
        %783 = vmatpush1.msra.mxu0 0.0
        %784 = vmatprep.subr.mxu0 0.0
        %785 = vmatpush1.msra.mxu0 0.0
        %786 = vmatprep.subr.mxu0 0.0
        %787 = vmatpush1.msra.mxu0 0.0
        %788 = vmatprep.subr.mxu0 0.0
        %789 = vmatpush1.msra.mxu0 0.0
        %790 = vmatprep.subr.mxu0 0.0
        %791 = vmatpush1.msra.mxu0 0.0
        %792 = vmatprep.subr.mxu0 0.0
        %793 = vmatpush1.msra.mxu0 0.0
        %794 = vmatprep.subr.mxu0 0.0
        %795 = vmatpush1.msra.mxu0 0.0
        %796 = vmatprep.subr.mxu0 0.0
        %797 = vmatpush1.msra.mxu0 0.0
        %798 = vmatprep.subr.mxu0 0.0
        %799 = vmatpush1.msra.mxu0 %v695
        %800 = vmatprep.subr.mxu0 0.0
        %801 = vmatpush2.msra.mxu0 0.0
        %802 = vmatprep.subr.mxu0 0.0
        %803 = vmatpush2.msra.mxu0 0.0
        %804 = vmatprep.subr.mxu0 0.0
        %805 = vmatpush2.msra.mxu0 0.0
        %806 = vmatprep.subr.mxu0 0.0
        %807 = vmatpush2.msra.mxu0 0.0
        %808 = vmatprep.subr.mxu0 0.0
        %809 = vmatpush2.msra.mxu0 0.0
        %810 = vmatprep.subr.mxu0 0.0
        %811 = vmatpush2.msra.mxu0 0.0
        %812 = vmatprep.subr.mxu0 0.0
        %813 = vmatpush2.msra.mxu0 0.0
        %814 = vmatprep.subr.mxu0 0.0
        %815 = vmatpush2.msra.mxu0 0.0
        %816 = vmatprep.subr.mxu0 0.0
        %817 = vmatpush2.msra.mxu0 0.0
        %818 = vmatprep.subr.mxu0 0.0
        %819 = vmatpush2.msra.mxu0 0.0
        %820 = vmatprep.subr.mxu0 0.0
        %821 = vmatpush2.msra.mxu0 0.0
        %822 = vmatprep.subr.mxu0 0.0
        %823 = vmatpush2.msra.mxu0 0.0
        %824 = vmatprep.subr.mxu0 0.0
        %825 = vmatpush2.msra.mxu0 0.0
        %826 = vmatprep.subr.mxu0 0.0
        %827 = vmatpush2.msra.mxu0 0.0
        %828 = vmatprep.subr.mxu0 0.0
        %829 = vmatpush2.msra.mxu0 0.0
        %830 = vmatprep.subr.mxu0 0.0
        %831 = vmatpush2.msra.mxu0 0.0
        %832 = vmatprep.mubr.f32.mxu0 0.0
        %833 = vmatmul.mubr.f32.gmra.mxu0 %v689
        %v834 = vpop.f32.mrf.mxu0
        %v835 = vadd.f32 0.0, %v834
        %v836 = vpop.f32.mrf.mxu0
        %837 = vdwg.mxu0
        %v838 = vadd.f32 %v671, %v764
        %v839 = vadd.f32 %v672, %v766
        %v840 = vadd.f32 %v673, %v835
        %s841 = scalar_lea.vmem %s1, 32
        %v842 = vld [vmem:[%s841] sm:$0xff]
        %843 = vrot.lane.b32.xlu0 %v184, 109
        %v844 = vpop.permute.xlu0 %843
        %845 = vrot.lane.b32.xlu0 %v191, 109
        %v846 = vpop.permute.xlu0 %845
        %847 = vrot.lane.b32.xlu0 %v185, 109
        %v848 = vpop.permute.xlu0 %847
        %849 = vrot.lane.b32.xlu0 %v192, 109
        %v850 = vpop.permute.xlu0 %849
        %vm851 = vcmask 891904
        %v852 = vsel %vm851, %v844, %v846
        %v853 = vsel %vm851, %v846, %v848
        %v854 = vsel %vm851, %v848, %v850
        %v856 = vsel %vm205, %v842, 0
        %v858 = vsel %vm209, %v852, 0
        %v860 = vsel %vm209, %v853, 0
        %v862 = vsel %vm209, %v854, 0
        %864 = vmatprep.subr.mxu0 0.0
        %865 = vmatpush1.msra.mxu0 0.0
        %866 = vmatprep.subr.mxu0 0.0
        %867 = vmatpush1.msra.mxu0 0.0
        %868 = vmatprep.subr.mxu0 0.0
        %869 = vmatpush1.msra.mxu0 0.0
        %870 = vmatprep.subr.mxu0 0.0
        %871 = vmatpush1.msra.mxu0 0.0
        %872 = vmatprep.subr.mxu0 0.0
        %873 = vmatpush1.msra.mxu0 0.0
        %874 = vmatprep.subr.mxu0 0.0
        %875 = vmatpush1.msra.mxu0 0.0
        %876 = vmatprep.subr.mxu0 0.0
        %877 = vmatpush1.msra.mxu0 0.0
        %878 = vmatprep.subr.mxu0 0.0
        %879 = vmatpush1.msra.mxu0 0.0
        %880 = vmatprep.subr.mxu0 0.0
        %881 = vmatpush1.msra.mxu0 0.0
        %882 = vmatprep.subr.mxu0 0.0
        %883 = vmatpush1.msra.mxu0 0.0
        %884 = vmatprep.subr.mxu0 0.0
        %885 = vmatpush1.msra.mxu0 0.0
        %886 = vmatprep.subr.mxu0 0.0
        %887 = vmatpush1.msra.mxu0 0.0
        %888 = vmatprep.subr.mxu0 0.0
        %889 = vmatpush1.msra.mxu0 0.0
        %890 = vmatprep.subr.mxu0 0.0
        %891 = vmatpush1.msra.mxu0 0.0
        %892 = vmatprep.subr.mxu0 0.0
        %893 = vmatpush1.msra.mxu0 0.0
        %894 = vmatprep.subr.mxu0 %v860
        %895 = vmatpush1.msra.mxu0 %v858
        %896 = vmatprep.subr.mxu0 0.0
        %897 = vmatpush2.msra.mxu0 0.0
        %898 = vmatprep.subr.mxu0 0.0
        %899 = vmatpush2.msra.mxu0 0.0
        %900 = vmatprep.subr.mxu0 0.0
        %901 = vmatpush2.msra.mxu0 0.0
        %902 = vmatprep.subr.mxu0 0.0
        %903 = vmatpush2.msra.mxu0 0.0
        %904 = vmatprep.subr.mxu0 0.0
        %905 = vmatpush2.msra.mxu0 0.0
        %906 = vmatprep.subr.mxu0 0.0
        %907 = vmatpush2.msra.mxu0 0.0
        %908 = vmatprep.subr.mxu0 0.0
        %909 = vmatpush2.msra.mxu0 0.0
        %910 = vmatprep.subr.mxu0 0.0
        %911 = vmatpush2.msra.mxu0 0.0
        %912 = vmatprep.subr.mxu0 0.0
        %913 = vmatpush2.msra.mxu0 0.0
        %914 = vmatprep.subr.mxu0 0.0
        %915 = vmatpush2.msra.mxu0 0.0
        %916 = vmatprep.subr.mxu0 0.0
        %917 = vmatpush2.msra.mxu0 0.0
        %918 = vmatprep.subr.mxu0 0.0
        %919 = vmatpush2.msra.mxu0 0.0
        %920 = vmatprep.subr.mxu0 0.0
        %921 = vmatpush2.msra.mxu0 0.0
        %922 = vmatprep.subr.mxu0 0.0
        %923 = vmatpush2.msra.mxu0 0.0
        %924 = vmatprep.subr.mxu0 0.0
        %925 = vmatpush2.msra.mxu0 0.0
        %926 = vmatprep.subr.mxu0 0.0
        %927 = vmatpush2.msra.mxu0 0.0
        %928 = vmatprep.mubr.f32.mxu0 0.0
        %929 = vmatmul.mubr.f32.gmra.mxu0 %v856
        %v930 = vpop.f32.mrf.mxu0
        %v931 = vadd.f32 0.0, %v930
        %v932 = vpop.f32.mrf.mxu0
        %v933 = vadd.f32 0.0, %v932
        %934 = vdwg.mxu0
        %935 = vmatprep.subr.mxu0 0.0
        %936 = vmatpush1.msra.mxu0 0.0
        %937 = vmatprep.subr.mxu0 0.0
        %938 = vmatpush1.msra.mxu0 0.0
        %939 = vmatprep.subr.mxu0 0.0
        %940 = vmatpush1.msra.mxu0 0.0
        %941 = vmatprep.subr.mxu0 0.0
        %942 = vmatpush1.msra.mxu0 0.0
        %943 = vmatprep.subr.mxu0 0.0
        %944 = vmatpush1.msra.mxu0 0.0
        %945 = vmatprep.subr.mxu0 0.0
        %946 = vmatpush1.msra.mxu0 0.0
        %947 = vmatprep.subr.mxu0 0.0
        %948 = vmatpush1.msra.mxu0 0.0
        %949 = vmatprep.subr.mxu0 0.0
        %950 = vmatpush1.msra.mxu0 0.0
        %951 = vmatprep.subr.mxu0 0.0
        %952 = vmatpush1.msra.mxu0 0.0
        %953 = vmatprep.subr.mxu0 0.0
        %954 = vmatpush1.msra.mxu0 0.0
        %955 = vmatprep.subr.mxu0 0.0
        %956 = vmatpush1.msra.mxu0 0.0
        %957 = vmatprep.subr.mxu0 0.0
        %958 = vmatpush1.msra.mxu0 0.0
        %959 = vmatprep.subr.mxu0 0.0
        %960 = vmatpush1.msra.mxu0 0.0
        %961 = vmatprep.subr.mxu0 0.0
        %962 = vmatpush1.msra.mxu0 0.0
        %963 = vmatprep.subr.mxu0 0.0
        %964 = vmatpush1.msra.mxu0 0.0
        %965 = vmatprep.subr.mxu0 0.0
        %966 = vmatpush1.msra.mxu0 %v862
        %967 = vmatprep.subr.mxu0 0.0
        %968 = vmatpush2.msra.mxu0 0.0
        %969 = vmatprep.subr.mxu0 0.0
        %970 = vmatpush2.msra.mxu0 0.0
        %971 = vmatprep.subr.mxu0 0.0
        %972 = vmatpush2.msra.mxu0 0.0
        %973 = vmatprep.subr.mxu0 0.0
        %974 = vmatpush2.msra.mxu0 0.0
        %975 = vmatprep.subr.mxu0 0.0
        %976 = vmatpush2.msra.mxu0 0.0
        %977 = vmatprep.subr.mxu0 0.0
        %978 = vmatpush2.msra.mxu0 0.0
        %979 = vmatprep.subr.mxu0 0.0
        %980 = vmatpush2.msra.mxu0 0.0
        %981 = vmatprep.subr.mxu0 0.0
        %982 = vmatpush2.msra.mxu0 0.0
        %983 = vmatprep.subr.mxu0 0.0
        %984 = vmatpush2.msra.mxu0 0.0
        %985 = vmatprep.subr.mxu0 0.0
        %986 = vmatpush2.msra.mxu0 0.0
        %987 = vmatprep.subr.mxu0 0.0
        %988 = vmatpush2.msra.mxu0 0.0
        %989 = vmatprep.subr.mxu0 0.0
        %990 = vmatpush2.msra.mxu0 0.0
        %991 = vmatprep.subr.mxu0 0.0
        %992 = vmatpush2.msra.mxu0 0.0
        %993 = vmatprep.subr.mxu0 0.0
        %994 = vmatpush2.msra.mxu0 0.0
        %995 = vmatprep.subr.mxu0 0.0
        %996 = vmatpush2.msra.mxu0 0.0
        %997 = vmatprep.subr.mxu0 0.0
        %998 = vmatpush2.msra.mxu0 0.0
        %999 = vmatprep.mubr.f32.mxu0 0.0
        %1000 = vmatmul.mubr.f32.gmra.mxu0 %v856
        %v1001 = vpop.f32.mrf.mxu0
        %v1002 = vadd.f32 0.0, %v1001
        %v1003 = vpop.f32.mrf.mxu0
        %1004 = vdwg.mxu0
        %v1005 = vadd.f32 %v838, %v931
        %v1006 = vadd.f32 %v839, %v933
        %v1007 = vadd.f32 %v840, %v1002
        %s1008 = scalar_lea.vmem %s1, 40
        %v1009 = vld [vmem:[%s1008] sm:$0xff]
        %1010 = vrot.lane.b32.xlu0 %v184, 108
        %v1011 = vpop.permute.xlu0 %1010
        %1012 = vrot.lane.b32.xlu0 %v191, 108
        %v1013 = vpop.permute.xlu0 %1012
        %1014 = vrot.lane.b32.xlu0 %v185, 108
        %v1015 = vpop.permute.xlu0 %1014
        %1016 = vrot.lane.b32.xlu0 %v192, 108
        %v1017 = vpop.permute.xlu0 %1016
        %vm1018 = vcmask 883712
        %v1019 = vsel %vm1018, %v1011, %v1013
        %v1020 = vsel %vm1018, %v1013, %v1015
        %v1021 = vsel %vm1018, %v1015, %v1017
        %v1023 = vsel %vm205, %v1009, 0
        %v1025 = vsel %vm209, %v1019, 0
        %v1027 = vsel %vm209, %v1020, 0
        %v1029 = vsel %vm209, %v1021, 0
        %1031 = vmatprep.subr.mxu0 0.0
        %1032 = vmatpush1.msra.mxu0 0.0
        %1033 = vmatprep.subr.mxu0 0.0
        %1034 = vmatpush1.msra.mxu0 0.0
        %1035 = vmatprep.subr.mxu0 0.0
        %1036 = vmatpush1.msra.mxu0 0.0
        %1037 = vmatprep.subr.mxu0 0.0
        %1038 = vmatpush1.msra.mxu0 0.0
        %1039 = vmatprep.subr.mxu0 0.0
        %1040 = vmatpush1.msra.mxu0 0.0
        %1041 = vmatprep.subr.mxu0 0.0
        %1042 = vmatpush1.msra.mxu0 0.0
        %1043 = vmatprep.subr.mxu0 0.0
        %1044 = vmatpush1.msra.mxu0 0.0
        %1045 = vmatprep.subr.mxu0 0.0
        %1046 = vmatpush1.msra.mxu0 0.0
        %1047 = vmatprep.subr.mxu0 0.0
        %1048 = vmatpush1.msra.mxu0 0.0
        %1049 = vmatprep.subr.mxu0 0.0
        %1050 = vmatpush1.msra.mxu0 0.0
        %1051 = vmatprep.subr.mxu0 0.0
        %1052 = vmatpush1.msra.mxu0 0.0
        %1053 = vmatprep.subr.mxu0 0.0
        %1054 = vmatpush1.msra.mxu0 0.0
        %1055 = vmatprep.subr.mxu0 0.0
        %1056 = vmatpush1.msra.mxu0 0.0
        %1057 = vmatprep.subr.mxu0 0.0
        %1058 = vmatpush1.msra.mxu0 0.0
        %1059 = vmatprep.subr.mxu0 0.0
        %1060 = vmatpush1.msra.mxu0 0.0
        %1061 = vmatprep.subr.mxu0 %v1027
        %1062 = vmatpush1.msra.mxu0 %v1025
        %1063 = vmatprep.subr.mxu0 0.0
        %1064 = vmatpush2.msra.mxu0 0.0
        %1065 = vmatprep.subr.mxu0 0.0
        %1066 = vmatpush2.msra.mxu0 0.0
        %1067 = vmatprep.subr.mxu0 0.0
        %1068 = vmatpush2.msra.mxu0 0.0
        %1069 = vmatprep.subr.mxu0 0.0
        %1070 = vmatpush2.msra.mxu0 0.0
        %1071 = vmatprep.subr.mxu0 0.0
        %1072 = vmatpush2.msra.mxu0 0.0
        %1073 = vmatprep.subr.mxu0 0.0
        %1074 = vmatpush2.msra.mxu0 0.0
        %1075 = vmatprep.subr.mxu0 0.0
        %1076 = vmatpush2.msra.mxu0 0.0
        %1077 = vmatprep.subr.mxu0 0.0
        %1078 = vmatpush2.msra.mxu0 0.0
        %1079 = vmatprep.subr.mxu0 0.0
        %1080 = vmatpush2.msra.mxu0 0.0
        %1081 = vmatprep.subr.mxu0 0.0
        %1082 = vmatpush2.msra.mxu0 0.0
        %1083 = vmatprep.subr.mxu0 0.0
        %1084 = vmatpush2.msra.mxu0 0.0
        %1085 = vmatprep.subr.mxu0 0.0
        %1086 = vmatpush2.msra.mxu0 0.0
        %1087 = vmatprep.subr.mxu0 0.0
        %1088 = vmatpush2.msra.mxu0 0.0
        %1089 = vmatprep.subr.mxu0 0.0
        %1090 = vmatpush2.msra.mxu0 0.0
        %1091 = vmatprep.subr.mxu0 0.0
        %1092 = vmatpush2.msra.mxu0 0.0
        %1093 = vmatprep.subr.mxu0 0.0
        %1094 = vmatpush2.msra.mxu0 0.0
        %1095 = vmatprep.mubr.f32.mxu0 0.0
        %1096 = vmatmul.mubr.f32.gmra.mxu0 %v1023
        %v1097 = vpop.f32.mrf.mxu0
        %v1098 = vadd.f32 0.0, %v1097
        %v1099 = vpop.f32.mrf.mxu0
        %v1100 = vadd.f32 0.0, %v1099
        %1101 = vdwg.mxu0
        %1102 = vmatprep.subr.mxu0 0.0
        %1103 = vmatpush1.msra.mxu0 0.0
        %1104 = vmatprep.subr.mxu0 0.0
        %1105 = vmatpush1.msra.mxu0 0.0
        %1106 = vmatprep.subr.mxu0 0.0
        %1107 = vmatpush1.msra.mxu0 0.0
        %1108 = vmatprep.subr.mxu0 0.0
        %1109 = vmatpush1.msra.mxu0 0.0
        %1110 = vmatprep.subr.mxu0 0.0
        %1111 = vmatpush1.msra.mxu0 0.0
        %1112 = vmatprep.subr.mxu0 0.0
        %1113 = vmatpush1.msra.mxu0 0.0
        %1114 = vmatprep.subr.mxu0 0.0
        %1115 = vmatpush1.msra.mxu0 0.0
        %1116 = vmatprep.subr.mxu0 0.0
        %1117 = vmatpush1.msra.mxu0 0.0
        %1118 = vmatprep.subr.mxu0 0.0
        %1119 = vmatpush1.msra.mxu0 0.0
        %1120 = vmatprep.subr.mxu0 0.0
        %1121 = vmatpush1.msra.mxu0 0.0
        %1122 = vmatprep.subr.mxu0 0.0
        %1123 = vmatpush1.msra.mxu0 0.0
        %1124 = vmatprep.subr.mxu0 0.0
        %1125 = vmatpush1.msra.mxu0 0.0
        %1126 = vmatprep.subr.mxu0 0.0
        %1127 = vmatpush1.msra.mxu0 0.0
        %1128 = vmatprep.subr.mxu0 0.0
        %1129 = vmatpush1.msra.mxu0 0.0
        %1130 = vmatprep.subr.mxu0 0.0
        %1131 = vmatpush1.msra.mxu0 0.0
        %1132 = vmatprep.subr.mxu0 0.0
        %1133 = vmatpush1.msra.mxu0 %v1029
        %1134 = vmatprep.subr.mxu0 0.0
        %1135 = vmatpush2.msra.mxu0 0.0
        %1136 = vmatprep.subr.mxu0 0.0
        %1137 = vmatpush2.msra.mxu0 0.0
        %1138 = vmatprep.subr.mxu0 0.0
        %1139 = vmatpush2.msra.mxu0 0.0
        %1140 = vmatprep.subr.mxu0 0.0
        %1141 = vmatpush2.msra.mxu0 0.0
        %1142 = vmatprep.subr.mxu0 0.0
        %1143 = vmatpush2.msra.mxu0 0.0
        %1144 = vmatprep.subr.mxu0 0.0
        %1145 = vmatpush2.msra.mxu0 0.0
        %1146 = vmatprep.subr.mxu0 0.0
        %1147 = vmatpush2.msra.mxu0 0.0
        %1148 = vmatprep.subr.mxu0 0.0
        %1149 = vmatpush2.msra.mxu0 0.0
        %1150 = vmatprep.subr.mxu0 0.0
        %1151 = vmatpush2.msra.mxu0 0.0
        %1152 = vmatprep.subr.mxu0 0.0
        %1153 = vmatpush2.msra.mxu0 0.0
        %1154 = vmatprep.subr.mxu0 0.0
        %1155 = vmatpush2.msra.mxu0 0.0
        %1156 = vmatprep.subr.mxu0 0.0
        %1157 = vmatpush2.msra.mxu0 0.0
        %1158 = vmatprep.subr.mxu0 0.0
        %1159 = vmatpush2.msra.mxu0 0.0
        %1160 = vmatprep.subr.mxu0 0.0
        %1161 = vmatpush2.msra.mxu0 0.0
        %1162 = vmatprep.subr.mxu0 0.0
        %1163 = vmatpush2.msra.mxu0 0.0
        %1164 = vmatprep.subr.mxu0 0.0
        %1165 = vmatpush2.msra.mxu0 0.0
        %1166 = vmatprep.mubr.f32.mxu0 0.0
        %1167 = vmatmul.mubr.f32.gmra.mxu0 %v1023
        %v1168 = vpop.f32.mrf.mxu0
        %v1169 = vadd.f32 0.0, %v1168
        %v1170 = vpop.f32.mrf.mxu0
        %1171 = vdwg.mxu0
        %v1172 = vadd.f32 %v1005, %v1098
        %v1173 = vadd.f32 %v1006, %v1100
        %v1174 = vadd.f32 %v1007, %v1169
        %s1175 = scalar_lea.vmem %s1, 48
        %v1176 = vld [vmem:[%s1175] sm:$0xff]
        %1177 = vrot.lane.b32.xlu0 %v184, 92
        %v1178 = vpop.permute.xlu0 %1177
        %1179 = vrot.lane.b32.xlu0 %v191, 92
        %v1180 = vpop.permute.xlu0 %1179
        %1181 = vrot.lane.b32.xlu0 %v185, 92
        %v1182 = vpop.permute.xlu0 %1181
        %1183 = vrot.lane.b32.xlu0 %v192, 92
        %v1184 = vpop.permute.xlu0 %1183
        %vm1185 = vcmask 752640
        %v1186 = vsel %vm1185, %v1178, %v1180
        %v1187 = vsel %vm1185, %v1180, %v1182
        %v1188 = vsel %vm1185, %v1182, %v1184
        %v1190 = vsel %vm205, %v1176, 0
        %v1192 = vsel %vm209, %v1186, 0
        %v1194 = vsel %vm209, %v1187, 0
        %v1196 = vsel %vm209, %v1188, 0
        %1198 = vmatprep.subr.mxu0 0.0
        %1199 = vmatpush1.msra.mxu0 0.0
        %1200 = vmatprep.subr.mxu0 0.0
        %1201 = vmatpush1.msra.mxu0 0.0
        %1202 = vmatprep.subr.mxu0 0.0
        %1203 = vmatpush1.msra.mxu0 0.0
        %1204 = vmatprep.subr.mxu0 0.0
        %1205 = vmatpush1.msra.mxu0 0.0
        %1206 = vmatprep.subr.mxu0 0.0
        %1207 = vmatpush1.msra.mxu0 0.0
        %1208 = vmatprep.subr.mxu0 0.0
        %1209 = vmatpush1.msra.mxu0 0.0
        %1210 = vmatprep.subr.mxu0 0.0
        %1211 = vmatpush1.msra.mxu0 0.0
        %1212 = vmatprep.subr.mxu0 0.0
        %1213 = vmatpush1.msra.mxu0 0.0
        %1214 = vmatprep.subr.mxu0 0.0
        %1215 = vmatpush1.msra.mxu0 0.0
        %1216 = vmatprep.subr.mxu0 0.0
        %1217 = vmatpush1.msra.mxu0 0.0
        %1218 = vmatprep.subr.mxu0 0.0
        %1219 = vmatpush1.msra.mxu0 0.0
        %1220 = vmatprep.subr.mxu0 0.0
        %1221 = vmatpush1.msra.mxu0 0.0
        %1222 = vmatprep.subr.mxu0 0.0
        %1223 = vmatpush1.msra.mxu0 0.0
        %1224 = vmatprep.subr.mxu0 0.0
        %1225 = vmatpush1.msra.mxu0 0.0
        %1226 = vmatprep.subr.mxu0 0.0
        %1227 = vmatpush1.msra.mxu0 0.0
        %1228 = vmatprep.subr.mxu0 %v1194
        %1229 = vmatpush1.msra.mxu0 %v1192
        %1230 = vmatprep.subr.mxu0 0.0
        %1231 = vmatpush2.msra.mxu0 0.0
        %1232 = vmatprep.subr.mxu0 0.0
        %1233 = vmatpush2.msra.mxu0 0.0
        %1234 = vmatprep.subr.mxu0 0.0
        %1235 = vmatpush2.msra.mxu0 0.0
        %1236 = vmatprep.subr.mxu0 0.0
        %1237 = vmatpush2.msra.mxu0 0.0
        %1238 = vmatprep.subr.mxu0 0.0
        %1239 = vmatpush2.msra.mxu0 0.0
        %1240 = vmatprep.subr.mxu0 0.0
        %1241 = vmatpush2.msra.mxu0 0.0
        %1242 = vmatprep.subr.mxu0 0.0
        %1243 = vmatpush2.msra.mxu0 0.0
        %1244 = vmatprep.subr.mxu0 0.0
        %1245 = vmatpush2.msra.mxu0 0.0
        %1246 = vmatprep.subr.mxu0 0.0
        %1247 = vmatpush2.msra.mxu0 0.0
        %1248 = vmatprep.subr.mxu0 0.0
        %1249 = vmatpush2.msra.mxu0 0.0
        %1250 = vmatprep.subr.mxu0 0.0
        %1251 = vmatpush2.msra.mxu0 0.0
        %1252 = vmatprep.subr.mxu0 0.0
        %1253 = vmatpush2.msra.mxu0 0.0
        %1254 = vmatprep.subr.mxu0 0.0
        %1255 = vmatpush2.msra.mxu0 0.0
        %1256 = vmatprep.subr.mxu0 0.0
        %1257 = vmatpush2.msra.mxu0 0.0
        %1258 = vmatprep.subr.mxu0 0.0
        %1259 = vmatpush2.msra.mxu0 0.0
        %1260 = vmatprep.subr.mxu0 0.0
        %1261 = vmatpush2.msra.mxu0 0.0
        %1262 = vmatprep.mubr.f32.mxu0 0.0
        %1263 = vmatmul.mubr.f32.gmra.mxu0 %v1190
        %v1264 = vpop.f32.mrf.mxu0
        %v1265 = vadd.f32 0.0, %v1264
        %v1266 = vpop.f32.mrf.mxu0
        %v1267 = vadd.f32 0.0, %v1266
        %1268 = vdwg.mxu0
        %1269 = vmatprep.subr.mxu0 0.0
        %1270 = vmatpush1.msra.mxu0 0.0
        %1271 = vmatprep.subr.mxu0 0.0
        %1272 = vmatpush1.msra.mxu0 0.0
        %1273 = vmatprep.subr.mxu0 0.0
        %1274 = vmatpush1.msra.mxu0 0.0
        %1275 = vmatprep.subr.mxu0 0.0
        %1276 = vmatpush1.msra.mxu0 0.0
        %1277 = vmatprep.subr.mxu0 0.0
        %1278 = vmatpush1.msra.mxu0 0.0
        %1279 = vmatprep.subr.mxu0 0.0
        %1280 = vmatpush1.msra.mxu0 0.0
        %1281 = vmatprep.subr.mxu0 0.0
        %1282 = vmatpush1.msra.mxu0 0.0
        %1283 = vmatprep.subr.mxu0 0.0
        %1284 = vmatpush1.msra.mxu0 0.0
        %1285 = vmatprep.subr.mxu0 0.0
        %1286 = vmatpush1.msra.mxu0 0.0
        %1287 = vmatprep.subr.mxu0 0.0
        %1288 = vmatpush1.msra.mxu0 0.0
        %1289 = vmatprep.subr.mxu0 0.0
        %1290 = vmatpush1.msra.mxu0 0.0
        %1291 = vmatprep.subr.mxu0 0.0
        %1292 = vmatpush1.msra.mxu0 0.0
        %1293 = vmatprep.subr.mxu0 0.0
        %1294 = vmatpush1.msra.mxu0 0.0
        %1295 = vmatprep.subr.mxu0 0.0
        %1296 = vmatpush1.msra.mxu0 0.0
        %1297 = vmatprep.subr.mxu0 0.0
        %1298 = vmatpush1.msra.mxu0 0.0
        %1299 = vmatprep.subr.mxu0 0.0
        %1300 = vmatpush1.msra.mxu0 %v1196
        %1301 = vmatprep.subr.mxu0 0.0
        %1302 = vmatpush2.msra.mxu0 0.0
        %1303 = vmatprep.subr.mxu0 0.0
        %1304 = vmatpush2.msra.mxu0 0.0
        %1305 = vmatprep.subr.mxu0 0.0
        %1306 = vmatpush2.msra.mxu0 0.0
        %1307 = vmatprep.subr.mxu0 0.0
        %1308 = vmatpush2.msra.mxu0 0.0
        %1309 = vmatprep.subr.mxu0 0.0
        %1310 = vmatpush2.msra.mxu0 0.0
        %1311 = vmatprep.subr.mxu0 0.0
        %1312 = vmatpush2.msra.mxu0 0.0
        %1313 = vmatprep.subr.mxu0 0.0
        %1314 = vmatpush2.msra.mxu0 0.0
        %1315 = vmatprep.subr.mxu0 0.0
        %1316 = vmatpush2.msra.mxu0 0.0
        %1317 = vmatprep.subr.mxu0 0.0
        %1318 = vmatpush2.msra.mxu0 0.0
        %1319 = vmatprep.subr.mxu0 0.0
        %1320 = vmatpush2.msra.mxu0 0.0
        %1321 = vmatprep.subr.mxu0 0.0
        %1322 = vmatpush2.msra.mxu0 0.0
        %1323 = vmatprep.subr.mxu0 0.0
        %1324 = vmatpush2.msra.mxu0 0.0
        %1325 = vmatprep.subr.mxu0 0.0
        %1326 = vmatpush2.msra.mxu0 0.0
        %1327 = vmatprep.subr.mxu0 0.0
        %1328 = vmatpush2.msra.mxu0 0.0
        %1329 = vmatprep.subr.mxu0 0.0
        %1330 = vmatpush2.msra.mxu0 0.0
        %1331 = vmatprep.subr.mxu0 0.0
        %1332 = vmatpush2.msra.mxu0 0.0
        %1333 = vmatprep.mubr.f32.mxu0 0.0
        %1334 = vmatmul.mubr.f32.gmra.mxu0 %v1190
        %v1335 = vpop.f32.mrf.mxu0
        %v1336 = vadd.f32 0.0, %v1335
        %v1337 = vpop.f32.mrf.mxu0
        %1338 = vdwg.mxu0
        %v1339 = vadd.f32 %v1172, %v1265
        %v1340 = vadd.f32 %v1173, %v1267
        %v1341 = vadd.f32 %v1174, %v1336
        %s1342 = scalar_lea.vmem %s1, 56
        %v1343 = vld [vmem:[%s1342] sm:$0xff]
        %1344 = vrot.lane.b32.xlu0 %v184, 91
        %v1345 = vpop.permute.xlu0 %1344
        %1346 = vrot.lane.b32.xlu0 %v191, 91
        %v1347 = vpop.permute.xlu0 %1346
        %1348 = vrot.lane.b32.xlu0 %v185, 91
        %v1349 = vpop.permute.xlu0 %1348
        %1350 = vrot.lane.b32.xlu0 %v192, 91
        %v1351 = vpop.permute.xlu0 %1350
        %vm1352 = vcmask 744448
        %v1353 = vsel %vm1352, %v1345, %v1347
        %v1354 = vsel %vm1352, %v1347, %v1349
        %v1355 = vsel %vm1352, %v1349, %v1351
        %v1357 = vsel %vm205, %v1343, 0
        %v1359 = vsel %vm209, %v1353, 0
        %v1361 = vsel %vm209, %v1354, 0
        %v1363 = vsel %vm209, %v1355, 0
        %1365 = vmatprep.subr.mxu0 0.0
        %1366 = vmatpush1.msra.mxu0 0.0
        %1367 = vmatprep.subr.mxu0 0.0
        %1368 = vmatpush1.msra.mxu0 0.0
        %1369 = vmatprep.subr.mxu0 0.0
        %1370 = vmatpush1.msra.mxu0 0.0
        %1371 = vmatprep.subr.mxu0 0.0
        %1372 = vmatpush1.msra.mxu0 0.0
        %1373 = vmatprep.subr.mxu0 0.0
        %1374 = vmatpush1.msra.mxu0 0.0
        %1375 = vmatprep.subr.mxu0 0.0
        %1376 = vmatpush1.msra.mxu0 0.0
        %1377 = vmatprep.subr.mxu0 0.0
        %1378 = vmatpush1.msra.mxu0 0.0
        %1379 = vmatprep.subr.mxu0 0.0
        %1380 = vmatpush1.msra.mxu0 0.0
        %1381 = vmatprep.subr.mxu0 0.0
        %1382 = vmatpush1.msra.mxu0 0.0
        %1383 = vmatprep.subr.mxu0 0.0
        %1384 = vmatpush1.msra.mxu0 0.0
        %1385 = vmatprep.subr.mxu0 0.0
        %1386 = vmatpush1.msra.mxu0 0.0
        %1387 = vmatprep.subr.mxu0 0.0
        %1388 = vmatpush1.msra.mxu0 0.0
        %1389 = vmatprep.subr.mxu0 0.0
        %1390 = vmatpush1.msra.mxu0 0.0
        %1391 = vmatprep.subr.mxu0 0.0
        %1392 = vmatpush1.msra.mxu0 0.0
        %1393 = vmatprep.subr.mxu0 0.0
        %1394 = vmatpush1.msra.mxu0 0.0
        %1395 = vmatprep.subr.mxu0 %v1361
        %1396 = vmatpush1.msra.mxu0 %v1359
        %1397 = vmatprep.subr.mxu0 0.0
        %1398 = vmatpush2.msra.mxu0 0.0
        %1399 = vmatprep.subr.mxu0 0.0
        %1400 = vmatpush2.msra.mxu0 0.0
        %1401 = vmatprep.subr.mxu0 0.0
        %1402 = vmatpush2.msra.mxu0 0.0
        %1403 = vmatprep.subr.mxu0 0.0
        %1404 = vmatpush2.msra.mxu0 0.0
        %1405 = vmatprep.subr.mxu0 0.0
        %1406 = vmatpush2.msra.mxu0 0.0
        %1407 = vmatprep.subr.mxu0 0.0
        %1408 = vmatpush2.msra.mxu0 0.0
        %1409 = vmatprep.subr.mxu0 0.0
        %1410 = vmatpush2.msra.mxu0 0.0
        %1411 = vmatprep.subr.mxu0 0.0
        %1412 = vmatpush2.msra.mxu0 0.0
        %1413 = vmatprep.subr.mxu0 0.0
        %1414 = vmatpush2.msra.mxu0 0.0
        %1415 = vmatprep.subr.mxu0 0.0
        %1416 = vmatpush2.msra.mxu0 0.0
        %1417 = vmatprep.subr.mxu0 0.0
        %1418 = vmatpush2.msra.mxu0 0.0
        %1419 = vmatprep.subr.mxu0 0.0
        %1420 = vmatpush2.msra.mxu0 0.0
        %1421 = vmatprep.subr.mxu0 0.0
        %1422 = vmatpush2.msra.mxu0 0.0
        %1423 = vmatprep.subr.mxu0 0.0
        %1424 = vmatpush2.msra.mxu0 0.0
        %1425 = vmatprep.subr.mxu0 0.0
        %1426 = vmatpush2.msra.mxu0 0.0
        %1427 = vmatprep.subr.mxu0 0.0
        %1428 = vmatpush2.msra.mxu0 0.0
        %1429 = vmatprep.mubr.f32.mxu0 0.0
        %1430 = vmatmul.mubr.f32.gmra.mxu0 %v1357
        %v1431 = vpop.f32.mrf.mxu0
        %v1432 = vadd.f32 0.0, %v1431
        %v1433 = vpop.f32.mrf.mxu0
        %v1434 = vadd.f32 0.0, %v1433
        %1435 = vdwg.mxu0
        %1436 = vmatprep.subr.mxu0 0.0
        %1437 = vmatpush1.msra.mxu0 0.0
        %1438 = vmatprep.subr.mxu0 0.0
        %1439 = vmatpush1.msra.mxu0 0.0
        %1440 = vmatprep.subr.mxu0 0.0
        %1441 = vmatpush1.msra.mxu0 0.0
        %1442 = vmatprep.subr.mxu0 0.0
        %1443 = vmatpush1.msra.mxu0 0.0
        %1444 = vmatprep.subr.mxu0 0.0
        %1445 = vmatpush1.msra.mxu0 0.0
        %1446 = vmatprep.subr.mxu0 0.0
        %1447 = vmatpush1.msra.mxu0 0.0
        %1448 = vmatprep.subr.mxu0 0.0
        %1449 = vmatpush1.msra.mxu0 0.0
        %1450 = vmatprep.subr.mxu0 0.0
        %1451 = vmatpush1.msra.mxu0 0.0
        %1452 = vmatprep.subr.mxu0 0.0
        %1453 = vmatpush1.msra.mxu0 0.0
        %1454 = vmatprep.subr.mxu0 0.0
        %1455 = vmatpush1.msra.mxu0 0.0
        %1456 = vmatprep.subr.mxu0 0.0
        %1457 = vmatpush1.msra.mxu0 0.0
        %1458 = vmatprep.subr.mxu0 0.0
        %1459 = vmatpush1.msra.mxu0 0.0
        %1460 = vmatprep.subr.mxu0 0.0
        %1461 = vmatpush1.msra.mxu0 0.0
        %1462 = vmatprep.subr.mxu0 0.0
        %1463 = vmatpush1.msra.mxu0 0.0
        %1464 = vmatprep.subr.mxu0 0.0
        %1465 = vmatpush1.msra.mxu0 0.0
        %1466 = vmatprep.subr.mxu0 0.0
        %1467 = vmatpush1.msra.mxu0 %v1363
        %1468 = vmatprep.subr.mxu0 0.0
        %1469 = vmatpush2.msra.mxu0 0.0
        %1470 = vmatprep.subr.mxu0 0.0
        %1471 = vmatpush2.msra.mxu0 0.0
        %1472 = vmatprep.subr.mxu0 0.0
        %1473 = vmatpush2.msra.mxu0 0.0
        %1474 = vmatprep.subr.mxu0 0.0
        %1475 = vmatpush2.msra.mxu0 0.0
        %1476 = vmatprep.subr.mxu0 0.0
        %1477 = vmatpush2.msra.mxu0 0.0
        %1478 = vmatprep.subr.mxu0 0.0
        %1479 = vmatpush2.msra.mxu0 0.0
        %1480 = vmatprep.subr.mxu0 0.0
        %1481 = vmatpush2.msra.mxu0 0.0
        %1482 = vmatprep.subr.mxu0 0.0
        %1483 = vmatpush2.msra.mxu0 0.0
        %1484 = vmatprep.subr.mxu0 0.0
        %1485 = vmatpush2.msra.mxu0 0.0
        %1486 = vmatprep.subr.mxu0 0.0
        %1487 = vmatpush2.msra.mxu0 0.0
        %1488 = vmatprep.subr.mxu0 0.0
        %1489 = vmatpush2.msra.mxu0 0.0
        %1490 = vmatprep.subr.mxu0 0.0
        %1491 = vmatpush2.msra.mxu0 0.0
        %1492 = vmatprep.subr.mxu0 0.0
        %1493 = vmatpush2.msra.mxu0 0.0
        %1494 = vmatprep.subr.mxu0 0.0
        %1495 = vmatpush2.msra.mxu0 0.0
        %1496 = vmatprep.subr.mxu0 0.0
        %1497 = vmatpush2.msra.mxu0 0.0
        %1498 = vmatprep.subr.mxu0 0.0
        %1499 = vmatpush2.msra.mxu0 0.0
        %1500 = vmatprep.mubr.f32.mxu0 0.0
        %1501 = vmatmul.mubr.f32.gmra.mxu0 %v1357
        %v1502 = vpop.f32.mrf.mxu0
        %v1503 = vadd.f32 0.0, %v1502
        %v1504 = vpop.f32.mrf.mxu0
        %1505 = vdwg.mxu0
        %v1506 = vadd.f32 %v1339, %v1432
        %v1507 = vadd.f32 %v1340, %v1434
        %v1508 = vadd.f32 %v1341, %v1503
        %s1509 = scalar_lea.vmem %s1, 64
        %v1510 = vld [vmem:[%s1509] sm:$0xff]
        %1511 = vrot.lane.b32.xlu0 %v184, 90
        %v1512 = vpop.permute.xlu0 %1511
        %1513 = vrot.lane.b32.xlu0 %v191, 90
        %v1514 = vpop.permute.xlu0 %1513
        %1515 = vrot.lane.b32.xlu0 %v185, 90
        %v1516 = vpop.permute.xlu0 %1515
        %1517 = vrot.lane.b32.xlu0 %v192, 90
        %v1518 = vpop.permute.xlu0 %1517
        %vm1519 = vcmask 736256
        %v1520 = vsel %vm1519, %v1512, %v1514
        %v1521 = vsel %vm1519, %v1514, %v1516
        %v1522 = vsel %vm1519, %v1516, %v1518
        %v1524 = vsel %vm205, %v1510, 0
        %v1526 = vsel %vm209, %v1520, 0
        %v1528 = vsel %vm209, %v1521, 0
        %v1530 = vsel %vm209, %v1522, 0
        %1532 = vmatprep.subr.mxu0 0.0
        %1533 = vmatpush1.msra.mxu0 0.0
        %1534 = vmatprep.subr.mxu0 0.0
        %1535 = vmatpush1.msra.mxu0 0.0
        %1536 = vmatprep.subr.mxu0 0.0
        %1537 = vmatpush1.msra.mxu0 0.0
        %1538 = vmatprep.subr.mxu0 0.0
        %1539 = vmatpush1.msra.mxu0 0.0
        %1540 = vmatprep.subr.mxu0 0.0
        %1541 = vmatpush1.msra.mxu0 0.0
        %1542 = vmatprep.subr.mxu0 0.0
        %1543 = vmatpush1.msra.mxu0 0.0
        %1544 = vmatprep.subr.mxu0 0.0
        %1545 = vmatpush1.msra.mxu0 0.0
        %1546 = vmatprep.subr.mxu0 0.0
        %1547 = vmatpush1.msra.mxu0 0.0
        %1548 = vmatprep.subr.mxu0 0.0
        %1549 = vmatpush1.msra.mxu0 0.0
        %1550 = vmatprep.subr.mxu0 0.0
        %1551 = vmatpush1.msra.mxu0 0.0
        %1552 = vmatprep.subr.mxu0 0.0
        %1553 = vmatpush1.msra.mxu0 0.0
        %1554 = vmatprep.subr.mxu0 0.0
        %1555 = vmatpush1.msra.mxu0 0.0
        %1556 = vmatprep.subr.mxu0 0.0
        %1557 = vmatpush1.msra.mxu0 0.0
        %1558 = vmatprep.subr.mxu0 0.0
        %1559 = vmatpush1.msra.mxu0 0.0
        %1560 = vmatprep.subr.mxu0 0.0
        %1561 = vmatpush1.msra.mxu0 0.0
        %1562 = vmatprep.subr.mxu0 %v1528
        %1563 = vmatpush1.msra.mxu0 %v1526
        %1564 = vmatprep.subr.mxu0 0.0
        %1565 = vmatpush2.msra.mxu0 0.0
        %1566 = vmatprep.subr.mxu0 0.0
        %1567 = vmatpush2.msra.mxu0 0.0
        %1568 = vmatprep.subr.mxu0 0.0
        %1569 = vmatpush2.msra.mxu0 0.0
        %1570 = vmatprep.subr.mxu0 0.0
        %1571 = vmatpush2.msra.mxu0 0.0
        %1572 = vmatprep.subr.mxu0 0.0
        %1573 = vmatpush2.msra.mxu0 0.0
        %1574 = vmatprep.subr.mxu0 0.0
        %1575 = vmatpush2.msra.mxu0 0.0
        %1576 = vmatprep.subr.mxu0 0.0
        %1577 = vmatpush2.msra.mxu0 0.0
        %1578 = vmatprep.subr.mxu0 0.0
        %1579 = vmatpush2.msra.mxu0 0.0
        %1580 = vmatprep.subr.mxu0 0.0
        %1581 = vmatpush2.msra.mxu0 0.0
        %1582 = vmatprep.subr.mxu0 0.0
        %1583 = vmatpush2.msra.mxu0 0.0
        %1584 = vmatprep.subr.mxu0 0.0
        %1585 = vmatpush2.msra.mxu0 0.0
        %1586 = vmatprep.subr.mxu0 0.0
        %1587 = vmatpush2.msra.mxu0 0.0
        %1588 = vmatprep.subr.mxu0 0.0
        %1589 = vmatpush2.msra.mxu0 0.0
        %1590 = vmatprep.subr.mxu0 0.0
        %1591 = vmatpush2.msra.mxu0 0.0
        %1592 = vmatprep.subr.mxu0 0.0
        %1593 = vmatpush2.msra.mxu0 0.0
        %1594 = vmatprep.subr.mxu0 0.0
        %1595 = vmatpush2.msra.mxu0 0.0
        %1596 = vmatprep.mubr.f32.mxu0 0.0
        %1597 = vmatmul.mubr.f32.gmra.mxu0 %v1524
        %v1598 = vpop.f32.mrf.mxu0
        %v1599 = vadd.f32 0.0, %v1598
        %v1600 = vpop.f32.mrf.mxu0
        %v1601 = vadd.f32 0.0, %v1600
        %1602 = vdwg.mxu0
        %1603 = vmatprep.subr.mxu0 0.0
        %1604 = vmatpush1.msra.mxu0 0.0
        %1605 = vmatprep.subr.mxu0 0.0
        %1606 = vmatpush1.msra.mxu0 0.0
        %1607 = vmatprep.subr.mxu0 0.0
        %1608 = vmatpush1.msra.mxu0 0.0
        %1609 = vmatprep.subr.mxu0 0.0
        %1610 = vmatpush1.msra.mxu0 0.0
        %1611 = vmatprep.subr.mxu0 0.0
        %1612 = vmatpush1.msra.mxu0 0.0
        %1613 = vmatprep.subr.mxu0 0.0
        %1614 = vmatpush1.msra.mxu0 0.0
        %1615 = vmatprep.subr.mxu0 0.0
        %1616 = vmatpush1.msra.mxu0 0.0
        %1617 = vmatprep.subr.mxu0 0.0
        %1618 = vmatpush1.msra.mxu0 0.0
        %1619 = vmatprep.subr.mxu0 0.0
        %1620 = vmatpush1.msra.mxu0 0.0
        %1621 = vmatprep.subr.mxu0 0.0
        %1622 = vmatpush1.msra.mxu0 0.0
        %1623 = vmatprep.subr.mxu0 0.0
        %1624 = vmatpush1.msra.mxu0 0.0
        %1625 = vmatprep.subr.mxu0 0.0
        %1626 = vmatpush1.msra.mxu0 0.0
        %1627 = vmatprep.subr.mxu0 0.0
        %1628 = vmatpush1.msra.mxu0 0.0
        %1629 = vmatprep.subr.mxu0 0.0
        %1630 = vmatpush1.msra.mxu0 0.0
        %1631 = vmatprep.subr.mxu0 0.0
        %1632 = vmatpush1.msra.mxu0 0.0
        %1633 = vmatprep.subr.mxu0 0.0
        %1634 = vmatpush1.msra.mxu0 %v1530
        %1635 = vmatprep.subr.mxu0 0.0
        %1636 = vmatpush2.msra.mxu0 0.0
        %1637 = vmatprep.subr.mxu0 0.0
        %1638 = vmatpush2.msra.mxu0 0.0
        %1639 = vmatprep.subr.mxu0 0.0
        %1640 = vmatpush2.msra.mxu0 0.0
        %1641 = vmatprep.subr.mxu0 0.0
        %1642 = vmatpush2.msra.mxu0 0.0
        %1643 = vmatprep.subr.mxu0 0.0
        %1644 = vmatpush2.msra.mxu0 0.0
        %1645 = vmatprep.subr.mxu0 0.0
        %1646 = vmatpush2.msra.mxu0 0.0
        %1647 = vmatprep.subr.mxu0 0.0
        %1648 = vmatpush2.msra.mxu0 0.0
        %1649 = vmatprep.subr.mxu0 0.0
        %1650 = vmatpush2.msra.mxu0 0.0
        %1651 = vmatprep.subr.mxu0 0.0
        %1652 = vmatpush2.msra.mxu0 0.0
        %1653 = vmatprep.subr.mxu0 0.0
        %1654 = vmatpush2.msra.mxu0 0.0
        %1655 = vmatprep.subr.mxu0 0.0
        %1656 = vmatpush2.msra.mxu0 0.0
        %1657 = vmatprep.subr.mxu0 0.0
        %1658 = vmatpush2.msra.mxu0 0.0
        %1659 = vmatprep.subr.mxu0 0.0
        %1660 = vmatpush2.msra.mxu0 0.0
        %1661 = vmatprep.subr.mxu0 0.0
        %1662 = vmatpush2.msra.mxu0 0.0
        %1663 = vmatprep.subr.mxu0 0.0
        %1664 = vmatpush2.msra.mxu0 0.0
        %1665 = vmatprep.subr.mxu0 0.0
        %1666 = vmatpush2.msra.mxu0 0.0
        %1667 = vmatprep.mubr.f32.mxu0 0.0
        %1668 = vmatmul.mubr.f32.gmra.mxu0 %v1524
        %v1669 = vpop.f32.mrf.mxu0
        %v1670 = vadd.f32 0.0, %v1669
        %v1671 = vpop.f32.mrf.mxu0
        %1672 = vdwg.mxu0
        %v1673 = vadd.f32 %v1506, %v1599
        %v1674 = vadd.f32 %v1507, %v1601
        %v1675 = vadd.f32 %v1508, %v1670
        %v1676 = vld [vmem:[%s2] sm:$0xff]
        %1678 = vset.pattern.permute.xlu0 0
        %1679 = vperm.xlu0 %1678, %v1676
        %v1680 = vpop.permute.xlu0 %1679
        %v1682 = vadd.f32 %v1673, %v1680
        %v1683 = vadd.f32 %v1674, %v1680
        %v1684 = vadd.f32 %v1675, %v1680
        %v1685 = vmax.f32 %v1682, 0.0
        %v1686 = vmax.f32 %v1683, 0.0
        %v1687 = vmax.f32 %v1684, 0.0
        %1688 = vst [vmem:[%s177] sm:$0xff] %v1685
        %1689 = vst [vmem:[%s177 + $0x8] sm:$0xff] %v1686
        %1690 = vst [vmem:[%s177 + $0x10] sm:$0xff] %v1687
        %s1691 = sand.u32 %s107, 1
        %s1692 = scalar_lea.sflag [#allocation3], %s1691
        %s1693 = sand.u32 %s107, 1
        %s1694 = smul.addr %s1693, 24
        %s1695 = scalar_lea.vmem [#allocation2], %s1694
        // Predicated region
        $region33: #{tpu_custom_call.1} parent=31 // pred_check
          %p1696 = pneg %p117
        $region34: #{tpu_custom_call.1} parent=31 // pred_check_branch
          %1698 = sbr.rel (%p1696) target = $region36
        $region35: #{tpu_custom_call.1} parent=31 // pred_region
          %s1699 = smul.u32 3, %s22
          %s1701 = ssub.s32 384, 384
          %1702 = vsyncadd %s1692, %s1701
          %s1703 = smul.addr %s21, 3
          %s1704 = sadd.s32 %s1699, %s1703
          %s1705 = smul.addr %s1704, 128
          %s1706 = scalar_lea.hbm %s3, %s1705
          %s1708 = sshll.u32 %s1695, 4
          %s1709 = int_to_ptr.vmem [resolvable:$true] %s1708
          %1711 = dma.vmem_to_hbm [thread:$0]  %s1709, 384, %s1706, %s1692
        $region36: #{tpu_custom_call.1} parent=31 // pred_fallthru
          _
      $region32: #{tpu_custom_call.1} parent=5 // pred_fallthru
        _
      %p1712 = scmp.le.s32.totalorder 2, %s12
      // Predicated region
      $region37: #{tpu_custom_call.1} parent=5 // pred_check
        %p1713 = pneg %p1712
      $region38: #{tpu_custom_call.1} parent=5 // pred_check_branch
        %1715 = sbr.rel (%p1713) target = $region40
      $region39: #{tpu_custom_call.1} parent=5 // pred_region
        %s1716 = ssub.s32 %s12, 2
        // Predicated region
        $region41: #{tpu_custom_call.1} parent=39 // pred_check
          %p1717 = pneg %p123
        $region42: #{tpu_custom_call.1} parent=39 // pred_check_branch
          %1719 = sbr.rel (%p1717) target = $region44
        $region43: #{tpu_custom_call.1} parent=39 // pred_region
          %s1720 = sand.u32 %s108, 1
          %s1721 = scalar_lea.sflag [#allocation3], %s1720
          %s1722 = sand.u32 %s108, 1
          %s1723 = smul.addr %s1722, 24
          %s1724 = scalar_lea.vmem [#allocation2], %s1723
          %1725 = dma.done %s1721, 384
        $region44: #{tpu_custom_call.1} parent=39 // pred_fallthru
          _
      $region40: #{tpu_custom_call.1} parent=5 // pred_fallthru
        _
    $region6: #{tpu_custom_call.1} parent=1 // loop_footer
      %s16 = sadd.s32 1, %s12
    $region7: #{tpu_custom_call.1} parent=1 // loop_footer_branch
      %11 = sbr.rel target = $region3
    $region8: #{tpu_custom_call.1} parent=1 // loop_exit
      _
    %1726 = vsyncpa [#allocation3], 1
    %s1727 = scalar_lea.sflag [#allocation3], 1
    %1728 = vsyncpa %s1727, 1

</llo_original>
